<compile_context>
chip_gen: v5e
topology: v5e:2x2
jax: 0.10.0
libtpu: 0.0.40
codegen_flags: <defaults>
</compile_context>

<pallas_src>
import jax
import jax.numpy as jnp
from jax.experimental import pallas as pl
from jax.experimental.pallas import tpu as pltpu


def _lstm_fc_kernel(
    x_ref,     # (T*B, I)   time-major rows: row t*B + b == x[b, t, :]
    wih0_ref,  # (I, 4H)    layer-0 W_ih^T, gate cols [i, f, o, g]
    b0_ref,    # (1, 4H)    layer-0 b_ih + b_hh,      [i, f, o, g]
    whh0_ref,  # (H, 4H)    layer-0 W_hh^T,           [i, f, o, g]
    w1_ref,    # (2H, 4H)   layer-1 [W_ih^T ; W_hh^T],[i, f, o, g]
    b1_ref,    # (1, 4H)    layer-1 b_ih + b_hh,      [i, f, o, g]
    wfc_ref,   # (1, H) if O == 1 (VPU tail) else (H, O) pre-transposed
    bfc_ref,   # (1, O)
    out_ref,   # (B, O)
):
    H = whh0_ref.shape[0]
    B, O = out_ref.shape
    T = x_ref.shape[0] // B

    # Layer-0 input projection for ALL timesteps: one MXU launch before the
    # recurrence (no h-dependence -> never on the serial chain).  Replaces the
    # wrapper einsum dispatch + xproj HBM round trip of the previous version.
    xp = (
        jnp.dot(x_ref[...], wih0_ref[...], preferred_element_type=jnp.float32)
        + b0_ref[...]
    )

    # Hoist the (1,4H) -> (B,4H) bias broadcast out of the loop
    # (JAX does not CSE broadcast_in_dim inside the unrolled body).
    b1b = jnp.broadcast_to(b1_ref[...], (B, 4 * H))

    def gate_math(gates, c):
        # Gate cols are [i, f, o, g] (permuted once at param-prep time) so the
        # three sigmoid gates form one contiguous slice -> 2 EUP launches per cell.
        sig = jax.nn.sigmoid(gates[:, : 3 * H])
        g_g = jnp.tanh(gates[:, 3 * H:])
        i_g = sig[:, :H]
        f_g = sig[:, H:2 * H]
        o_g = sig[:, 2 * H:]
        c_new = f_g * c + i_g * g_g
        h_new = o_g * jnp.tanh(c_new)
        return h_new, c_new

    h0 = c0 = h1 = c1 = jnp.zeros((B, H), jnp.float32)

    # Fully unrolled recurrence (T static) -> LLO scheduler can interleave
    # MXU / EUP / VPU work across steps.
    # TODO(synk): if tolerance allows, cast whh0/w1 and the h carries to bfloat16
    # for these two dots (keep f32 accumulate) to cut MXU passes on the serial chain.
    for t in range(T):
        # Layer 0: only the recurrent matmul sits on the critical path; the
        # per-step xp rows are a free static slice of an in-register value.
        g0 = xp[t * B:(t + 1) * B, :] + jnp.dot(
            h0, whh0_ref[...], preferred_element_type=jnp.float32
        )
        h0, c0 = gate_math(g0, c0)
        # Layer 1: single fused, lane-aligned (B, 2H=128) matmul.  One concat per
        # step is cheaper than the single-(B,2H)-carry + two masked write-backs
        # alternative (same lane rotate plus an extra select on the same chain).
        hcat = jnp.concatenate([h0, h1], axis=1)
        g1 = jnp.dot(hcat, w1_ref[...], preferred_element_type=jnp.float32) + b1b
        h1, c1 = gate_math(g1, c1)

    if O == 1:
        # Single-column fc: VPU multiply + lane reduction (avoids an N=1 MXU launch).
        out_ref[...] = (
            jnp.sum(h1 * wfc_ref[...], axis=-1, keepdims=True) + bfc_ref[...]
        )
    else:
        # wfc pre-transposed to (H, O) at prep time -> plain (B,H)@(H,O) dot.
        out_ref[...] = (
            jnp.dot(h1, wfc_ref[...], preferred_element_type=jnp.float32)
            + bfc_ref[...]
        )


def _reorder_gates(w, H):
    """Permute the last axis from PyTorch gate order [i, f, g, o] to [i, f, o, g]."""
    return jnp.concatenate(
        [w[..., : 2 * H], w[..., 3 * H:], w[..., 2 * H:3 * H]], axis=-1
    )


def prepare_params(torch_params):
    """One-time (model-load) repack of PyTorch-layout weights for the kernel.

    Hoisted out of the per-call forward so gate reorders / concats / bias sums /
    the fc transpose never appear as per-inference XLA dispatches.
    """
    tp = torch_params
    H = tp["w_hh_l0"].shape[1]
    O = tp["fc_w"].shape[0]
    f32 = lambda a: jnp.asarray(a, jnp.float32)
    return {
        "wih0": _reorder_gates(f32(tp["w_ih_l0"]).T, H),                       # (I, 4H)
        "b0": _reorder_gates((f32(tp["b_ih_l0"]) + f32(tp["b_hh_l0"])).reshape(1, -1), H),
        "whh0": _reorder_gates(f32(tp["w_hh_l0"]).T, H),                       # (H, 4H)
        "w1": jnp.concatenate(
            [_reorder_gates(f32(tp["w_ih_l1"]).T, H),
             _reorder_gates(f32(tp["w_hh_l1"]).T, H)], axis=0),                # (2H, 4H)
        "b1": _reorder_gates((f32(tp["b_ih_l1"]) + f32(tp["b_hh_l1"])).reshape(1, -1), H),
        # O == 1 keeps (1, H) for the VPU tail; otherwise pre-transpose to (H, O).
        "wfc": f32(tp["fc_w"]) if O == 1 else f32(tp["fc_w"]).T,
        "bfc": f32(tp["fc_b"]).reshape(1, O),
    }


def lstm_model_forward(x, kp):
    """x: (B, T, I) float32, batch_first like the PyTorch module. Returns (B, O)."""
    B, T, I = x.shape
    O = kp["bfc"].shape[1]

    # Only per-call wrapper op: a tiny (384 B at B=2,T=8,I=6) time-major flatten of
    # x.  The heavy layer-0 input projection now runs inside the kernel.
    x_k = jnp.transpose(x.astype(jnp.float32), (1, 0, 2)).reshape(T * B, I)

    vmem = pl.BlockSpec(memory_space=pltpu.MemorySpace.VMEM)
    args = (x_k, kp["wih0"], kp["b0"], kp["whh0"], kp["w1"], kp["b1"],
            kp["wfc"], kp["bfc"])

    # Whole problem fits in ~0.25 MiB of VMEM -> no grid / tiling needed on any
    # generation (well under v7x's 32 MiB scoped default).
    # TODO(synk): once B >= 16, add a batch grid axis with
    #   dimension_semantics=("parallel",) so v7x's two TensorCores split the batch,
    #   and switch x to a time-chunked BlockSpec if T*B*4H*4 bytes nears VMEM.
    # Serving note: pad/pack requests to B >= 8 (sublane width); latency is flat up
    # to 8 rows, so that is free throughput on all generations.
    return pl.pallas_call(
        _lstm_fc_kernel,
        out_shape=jax.ShapeDtypeStruct((B, O), jnp.float32),
        in_specs=[vmem] * len(args),
        out_specs=vmem,
    )(*args)


def init_torch_params(key, input_size=6, hidden_size=64, output_size=1):
    """Deterministic synthetic parameters in PyTorch layout / naming."""
    H, I, O = hidden_size, input_size, output_size
    k = 1.0 / jnp.sqrt(jnp.float32(H))
    keys = jax.random.split(key, 10)
    u = lambda kk, shape: jax.random.uniform(kk, shape, jnp.float32, -k, k)
    return {
        "w_ih_l0": u(keys[0], (4 * H, I)), "w_hh_l0": u(keys[1], (4 * H, H)),
        "b_ih_l0": u(keys[2], (4 * H,)),   "b_hh_l0": u(keys[3], (4 * H,)),
        "w_ih_l1": u(keys[4], (4 * H, H)), "w_hh_l1": u(keys[5], (4 * H, H)),
        "b_ih_l1": u(keys[6], (4 * H,)),   "b_hh_l1": u(keys[7], (4 * H,)),
        "fc_w": u(keys[8], (O, H)),        "fc_b": u(keys[9], (O,)),
    }


def _reference_forward(x, tp):
    """Pure-JAX reference mirroring nn.LSTM(I, H, 2, batch_first=True) + Linear."""
    H = tp["w_hh_l0"].shape[1]

    def cell(x_t, h, c, w_ih, w_hh, b_ih, b_hh):
        gates = x_t @ w_ih.T + h @ w_hh.T + b_ih + b_hh
        i = jax.nn.sigmoid(gates[:, 0 * H:1 * H])
        f = jax.nn.sigmoid(gates[:, 1 * H:2 * H])
        g = jnp.tanh(gates[:, 2 * H:3 * H])
        o = jax.nn.sigmoid(gates[:, 3 * H:4 * H])
        c = f * c + i * g
        h = o * jnp.tanh(c)
        return h, c

    B, T, _ = x.shape
    h0 = c0 = h1 = c1 = jnp.zeros((B, H), jnp.float32)
    for t in range(T):
        h0, c0 = cell(x[:, t, :], h0, c0,
                      tp["w_ih_l0"], tp["w_hh_l0"], tp["b_ih_l0"], tp["b_hh_l0"])
        h1, c1 = cell(h0, h1, c1,
                      tp["w_ih_l1"], tp["w_hh_l1"], tp["b_ih_l1"], tp["b_hh_l1"])
    return h1 @ tp["fc_w"].T + tp["fc_b"]


if __name__ == "__main__":
    B, T, I, H, O = 2, 8, 6, 64, 1
    key = jax.random.PRNGKey(0)
    k_x, k_p = jax.random.split(key)
    x = jax.random.normal(k_x, (B, T, I), jnp.float32)
    torch_params = init_torch_params(k_p, input_size=I, hidden_size=H, output_size=O)

    # One-time weight repack, deliberately outside the per-call forward.
    kernel_params = jax.tree_util.tree_map(jnp.asarray, prepare_params(torch_params))

    fwd = jax.jit(lstm_model_forward)
    out = jax.block_until_ready(fwd(x, kernel_params))

    ref = _reference_forward(x, torch_params)
    assert out.shape == (B, O)
    assert jnp.allclose(out, ref, atol=1e-4, rtol=1e-4), (out, ref)
    # Benchmark note: validate wrapper-hoisting wins with an xprof trace
    # (sum all XLA Ops for the jit, min over repeats), not time.perf_counter.
    print("KERNEL_OK")
</pallas_src>

<mosaic_0001>
module attributes {stable_mosaic.version = 11 : i64} {
  func.func @_lstm_fc_kernel(%arg0: memref<16x6xf32, #tpu.memory_space<vmem>>, %arg1: memref<6x256xf32, #tpu.memory_space<vmem>>, %arg2: memref<1x256xf32, #tpu.memory_space<vmem>>, %arg3: memref<64x256xf32, #tpu.memory_space<vmem>>, %arg4: memref<128x256xf32, #tpu.memory_space<vmem>>, %arg5: memref<1x256xf32, #tpu.memory_space<vmem>>, %arg6: memref<1x64xf32, #tpu.memory_space<vmem>>, %arg7: memref<1x1xf32, #tpu.memory_space<vmem>>, %arg8: memref<2x1xf32, #tpu.memory_space<vmem>>) attributes {dimension_semantics = [], scalar_prefetch = 0 : i64, scratch_operands = 0 : i64, tpu.core_type = #tpu.core_type<tc>} {
    %c0 = arith.constant 0 : index
    %c0_0 = arith.constant 0 : index
    %0 = vector.load %arg0[%c0, %c0_0] : memref<16x6xf32, #tpu.memory_space<vmem>>, vector<16x6xf32>
    %c0_1 = arith.constant 0 : index
    %c0_2 = arith.constant 0 : index
    %1 = vector.load %arg1[%c0_1, %c0_2] : memref<6x256xf32, #tpu.memory_space<vmem>>, vector<6x256xf32>
    %cst = arith.constant dense<0.000000e+00> : vector<16x256xf32>
    %2 = tpu.matmul %0, %1, %cst {dimension_numbers = #tpu.dot_dimension_numbers<[1], [0], [0], [1], [0, 0, 1, 1], [], []>} : vector<16x6xf32>, vector<6x256xf32>, vector<16x256xf32> -> vector<16x256xf32>
    %c0_3 = arith.constant 0 : index
    %c0_4 = arith.constant 0 : index
    %3 = vector.load %arg2[%c0_3, %c0_4] : memref<1x256xf32, #tpu.memory_space<vmem>>, vector<1x256xf32>
    %4 = vector.broadcast %3 : vector<1x256xf32> to vector<16x256xf32>
    %5 = arith.addf %2, %4 : vector<16x256xf32>
    %c0_5 = arith.constant 0 : index
    %c0_6 = arith.constant 0 : index
    %6 = vector.load %arg5[%c0_5, %c0_6] : memref<1x256xf32, #tpu.memory_space<vmem>>, vector<1x256xf32>
    %7 = vector.shape_cast %6 : vector<1x256xf32> to vector<1x256xf32>
    %8 = vector.broadcast %7 : vector<1x256xf32> to vector<2x256xf32>
    %cst_7 = arith.constant 0.000000e+00 : f32
    %9 = vector.broadcast %cst_7 : f32 to vector<2x64xf32>
    %10 = vector.extract_strided_slice %5 {offsets = [0, 0], sizes = [2, 256], strides = [1, 1]} : vector<16x256xf32> to vector<2x256xf32>
    %c0_8 = arith.constant 0 : index
    %c0_9 = arith.constant 0 : index
    %11 = vector.load %arg3[%c0_8, %c0_9] : memref<64x256xf32, #tpu.memory_space<vmem>>, vector<64x256xf32>
    %cst_10 = arith.constant dense<0.000000e+00> : vector<2x256xf32>
    %12 = tpu.matmul %9, %11, %cst_10 {dimension_numbers = #tpu.dot_dimension_numbers<[1], [0], [0], [1], [0, 0, 1, 1], [], []>} : vector<2x64xf32>, vector<64x256xf32>, vector<2x256xf32> -> vector<2x256xf32>
    %13 = arith.addf %10, %12 : vector<2x256xf32>
    %14 = vector.extract_strided_slice %13 {offsets = [0, 0], sizes = [2, 192], strides = [1, 1]} : vector<2x256xf32> to vector<2x192xf32>
    %15 = arith.negf %14 : vector<2x192xf32>
    %16 = math.exp %15 : vector<2x192xf32>
    %cst_11 = arith.constant 1.000000e+00 : f32
    %17 = vector.broadcast %cst_11 : f32 to vector<2x192xf32>
    %18 = arith.addf %17, %16 : vector<2x192xf32>
    %19 = arith.divf %17, %18 : vector<2x192xf32>
    %20 = vector.extract_strided_slice %13 {offsets = [0, 192], sizes = [2, 64], strides = [1, 1]} : vector<2x256xf32> to vector<2x64xf32>
    %21 = math.tanh %20 : vector<2x64xf32>
    %22 = vector.extract_strided_slice %19 {offsets = [0, 0], sizes = [2, 64], strides = [1, 1]} : vector<2x192xf32> to vector<2x64xf32>
    %23 = vector.extract_strided_slice %19 {offsets = [0, 64], sizes = [2, 64], strides = [1, 1]} : vector<2x192xf32> to vector<2x64xf32>
    %24 = vector.extract_strided_slice %19 {offsets = [0, 128], sizes = [2, 64], strides = [1, 1]} : vector<2x192xf32> to vector<2x64xf32>
    %25 = arith.mulf %23, %9 : vector<2x64xf32>
    %26 = arith.mulf %22, %21 : vector<2x64xf32>
    %27 = arith.addf %25, %26 : vector<2x64xf32>
    %28 = math.tanh %27 : vector<2x64xf32>
    %29 = arith.mulf %24, %28 : vector<2x64xf32>
    %30 = tpu.concatenate %29, %9 in 1 : vector<2x64xf32>, vector<2x64xf32> -> vector<2x128xf32>
    %c0_12 = arith.constant 0 : index
    %c0_13 = arith.constant 0 : index
    %31 = vector.load %arg4[%c0_12, %c0_13] : memref<128x256xf32, #tpu.memory_space<vmem>>, vector<128x256xf32>
    %cst_14 = arith.constant dense<0.000000e+00> : vector<2x256xf32>
    %32 = tpu.matmul %30, %31, %cst_14 {dimension_numbers = #tpu.dot_dimension_numbers<[1], [0], [0], [1], [0, 0, 1, 1], [], []>} : vector<2x128xf32>, vector<128x256xf32>, vector<2x256xf32> -> vector<2x256xf32>
    %33 = arith.addf %32, %8 : vector<2x256xf32>
    %34 = vector.extract_strided_slice %33 {offsets = [0, 0], sizes = [2, 192], strides = [1, 1]} : vector<2x256xf32> to vector<2x192xf32>
    %35 = arith.negf %34 : vector<2x192xf32>
    %36 = math.exp %35 : vector<2x192xf32>
    %cst_15 = arith.constant 1.000000e+00 : f32
    %37 = vector.broadcast %cst_15 : f32 to vector<2x192xf32>
    %38 = arith.addf %37, %36 : vector<2x192xf32>
    %39 = arith.divf %37, %38 : vector<2x192xf32>
    %40 = vector.extract_strided_slice %33 {offsets = [0, 192], sizes = [2, 64], strides = [1, 1]} : vector<2x256xf32> to vector<2x64xf32>
    %41 = math.tanh %40 : vector<2x64xf32>
    %42 = vector.extract_strided_slice %39 {offsets = [0, 0], sizes = [2, 64], strides = [1, 1]} : vector<2x192xf32> to vector<2x64xf32>
    %43 = vector.extract_strided_slice %39 {offsets = [0, 64], sizes = [2, 64], strides = [1, 1]} : vector<2x192xf32> to vector<2x64xf32>
    %44 = vector.extract_strided_slice %39 {offsets = [0, 128], sizes = [2, 64], strides = [1, 1]} : vector<2x192xf32> to vector<2x64xf32>
    %45 = arith.mulf %43, %9 : vector<2x64xf32>
    %46 = arith.mulf %42, %41 : vector<2x64xf32>
    %47 = arith.addf %45, %46 : vector<2x64xf32>
    %48 = math.tanh %47 : vector<2x64xf32>
    %49 = arith.mulf %44, %48 : vector<2x64xf32>
    %50 = vector.extract_strided_slice %5 {offsets = [2, 0], sizes = [2, 256], strides = [1, 1]} : vector<16x256xf32> to vector<2x256xf32>
    %c0_16 = arith.constant 0 : index
    %c0_17 = arith.constant 0 : index
    %51 = vector.load %arg3[%c0_16, %c0_17] : memref<64x256xf32, #tpu.memory_space<vmem>>, vector<64x256xf32>
    %cst_18 = arith.constant dense<0.000000e+00> : vector<2x256xf32>
    %52 = tpu.matmul %29, %51, %cst_18 {dimension_numbers = #tpu.dot_dimension_numbers<[1], [0], [0], [1], [0, 0, 1, 1], [], []>} : vector<2x64xf32>, vector<64x256xf32>, vector<2x256xf32> -> vector<2x256xf32>
    %53 = arith.addf %50, %52 : vector<2x256xf32>
    %54 = vector.extract_strided_slice %53 {offsets = [0, 0], sizes = [2, 192], strides = [1, 1]} : vector<2x256xf32> to vector<2x192xf32>
    %55 = arith.negf %54 : vector<2x192xf32>
    %56 = math.exp %55 : vector<2x192xf32>
    %cst_19 = arith.constant 1.000000e+00 : f32
    %57 = vector.broadcast %cst_19 : f32 to vector<2x192xf32>
    %58 = arith.addf %57, %56 : vector<2x192xf32>
    %59 = arith.divf %57, %58 : vector<2x192xf32>
    %60 = vector.extract_strided_slice %53 {offsets = [0, 192], sizes = [2, 64], strides = [1, 1]} : vector<2x256xf32> to vector<2x64xf32>
    %61 = math.tanh %60 : vector<2x64xf32>
    %62 = vector.extract_strided_slice %59 {offsets = [0, 0], sizes = [2, 64], strides = [1, 1]} : vector<2x192xf32> to vector<2x64xf32>
    %63 = vector.extract_strided_slice %59 {offsets = [0, 64], sizes = [2, 64], strides = [1, 1]} : vector<2x192xf32> to vector<2x64xf32>
    %64 = vector.extract_strided_slice %59 {offsets = [0, 128], sizes = [2, 64], strides = [1, 1]} : vector<2x192xf32> to vector<2x64xf32>
    %65 = arith.mulf %63, %27 : vector<2x64xf32>
    %66 = arith.mulf %62, %61 : vector<2x64xf32>
    %67 = arith.addf %65, %66 : vector<2x64xf32>
    %68 = math.tanh %67 : vector<2x64xf32>
    %69 = arith.mulf %64, %68 : vector<2x64xf32>
    %70 = tpu.concatenate %69, %49 in 1 : vector<2x64xf32>, vector<2x64xf32> -> vector<2x128xf32>
    %c0_20 = arith.constant 0 : index
    %c0_21 = arith.constant 0 : index
    %71 = vector.load %arg4[%c0_20, %c0_21] : memref<128x256xf32, #tpu.memory_space<vmem>>, vector<128x256xf32>
    %cst_22 = arith.constant dense<0.000000e+00> : vector<2x256xf32>
    %72 = tpu.matmul %70, %71, %cst_22 {dimension_numbers = #tpu.dot_dimension_numbers<[1], [0], [0], [1], [0, 0, 1, 1], [], []>} : vector<2x128xf32>, vector<128x256xf32>, vector<2x256xf32> -> vector<2x256xf32>
    %73 = arith.addf %72, %8 : vector<2x256xf32>
    %74 = vector.extract_strided_slice %73 {offsets = [0, 0], sizes = [2, 192], strides = [1, 1]} : vector<2x256xf32> to vector<2x192xf32>
    %75 = arith.negf %74 : vector<2x192xf32>
    %76 = math.exp %75 : vector<2x192xf32>
    %cst_23 = arith.constant 1.000000e+00 : f32
    %77 = vector.broadcast %cst_23 : f32 to vector<2x192xf32>
    %78 = arith.addf %77, %76 : vector<2x192xf32>
    %79 = arith.divf %77, %78 : vector<2x192xf32>
    %80 = vector.extract_strided_slice %73 {offsets = [0, 192], sizes = [2, 64], strides = [1, 1]} : vector<2x256xf32> to vector<2x64xf32>
    %81 = math.tanh %80 : vector<2x64xf32>
    %82 = vector.extract_strided_slice %79 {offsets = [0, 0], sizes = [2, 64], strides = [1, 1]} : vector<2x192xf32> to vector<2x64xf32>
    %83 = vector.extract_strided_slice %79 {offsets = [0, 64], sizes = [2, 64], strides = [1, 1]} : vector<2x192xf32> to vector<2x64xf32>
    %84 = vector.extract_strided_slice %79 {offsets = [0, 128], sizes = [2, 64], strides = [1, 1]} : vector<2x192xf32> to vector<2x64xf32>
    %85 = arith.mulf %83, %47 : vector<2x64xf32>
    %86 = arith.mulf %82, %81 : vector<2x64xf32>
    %87 = arith.addf %85, %86 : vector<2x64xf32>
    %88 = math.tanh %87 : vector<2x64xf32>
    %89 = arith.mulf %84, %88 : vector<2x64xf32>
    %90 = vector.extract_strided_slice %5 {offsets = [4, 0], sizes = [2, 256], strides = [1, 1]} : vector<16x256xf32> to vector<2x256xf32>
    %c0_24 = arith.constant 0 : index
    %c0_25 = arith.constant 0 : index
    %91 = vector.load %arg3[%c0_24, %c0_25] : memref<64x256xf32, #tpu.memory_space<vmem>>, vector<64x256xf32>
    %cst_26 = arith.constant dense<0.000000e+00> : vector<2x256xf32>
    %92 = tpu.matmul %69, %91, %cst_26 {dimension_numbers = #tpu.dot_dimension_numbers<[1], [0], [0], [1], [0, 0, 1, 1], [], []>} : vector<2x64xf32>, vector<64x256xf32>, vector<2x256xf32> -> vector<2x256xf32>
    %93 = arith.addf %90, %92 : vector<2x256xf32>
    %94 = vector.extract_strided_slice %93 {offsets = [0, 0], sizes = [2, 192], strides = [1, 1]} : vector<2x256xf32> to vector<2x192xf32>
    %95 = arith.negf %94 : vector<2x192xf32>
    %96 = math.exp %95 : vector<2x192xf32>
    %cst_27 = arith.constant 1.000000e+00 : f32
    %97 = vector.broadcast %cst_27 : f32 to vector<2x192xf32>
    %98 = arith.addf %97, %96 : vector<2x192xf32>
    %99 = arith.divf %97, %98 : vector<2x192xf32>
    %100 = vector.extract_strided_slice %93 {offsets = [0, 192], sizes = [2, 64], strides = [1, 1]} : vector<2x256xf32> to vector<2x64xf32>
    %101 = math.tanh %100 : vector<2x64xf32>
    %102 = vector.extract_strided_slice %99 {offsets = [0, 0], sizes = [2, 64], strides = [1, 1]} : vector<2x192xf32> to vector<2x64xf32>
    %103 = vector.extract_strided_slice %99 {offsets = [0, 64], sizes = [2, 64], strides = [1, 1]} : vector<2x192xf32> to vector<2x64xf32>
    %104 = vector.extract_strided_slice %99 {offsets = [0, 128], sizes = [2, 64], strides = [1, 1]} : vector<2x192xf32> to vector<2x64xf32>
    %105 = arith.mulf %103, %67 : vector<2x64xf32>
    %106 = arith.mulf %102, %101 : vector<2x64xf32>
    %107 = arith.addf %105, %106 : vector<2x64xf32>
    %108 = math.tanh %107 : vector<2x64xf32>
    %109 = arith.mulf %104, %108 : vector<2x64xf32>
    %110 = tpu.concatenate %109, %89 in 1 : vector<2x64xf32>, vector<2x64xf32> -> vector<2x128xf32>
    %c0_28 = arith.constant 0 : index
    %c0_29 = arith.constant 0 : index
    %111 = vector.load %arg4[%c0_28, %c0_29] : memref<128x256xf32, #tpu.memory_space<vmem>>, vector<128x256xf32>
    %cst_30 = arith.constant dense<0.000000e+00> : vector<2x256xf32>
    %112 = tpu.matmul %110, %111, %cst_30 {dimension_numbers = #tpu.dot_dimension_numbers<[1], [0], [0], [1], [0, 0, 1, 1], [], []>} : vector<2x128xf32>, vector<128x256xf32>, vector<2x256xf32> -> vector<2x256xf32>
    %113 = arith.addf %112, %8 : vector<2x256xf32>
    %114 = vector.extract_strided_slice %113 {offsets = [0, 0], sizes = [2, 192], strides = [1, 1]} : vector<2x256xf32> to vector<2x192xf32>
    %115 = arith.negf %114 : vector<2x192xf32>
    %116 = math.exp %115 : vector<2x192xf32>
    %cst_31 = arith.constant 1.000000e+00 : f32
    %117 = vector.broadcast %cst_31 : f32 to vector<2x192xf32>
    %118 = arith.addf %117, %116 : vector<2x192xf32>
    %119 = arith.divf %117, %118 : vector<2x192xf32>
    %120 = vector.extract_strided_slice %113 {offsets = [0, 192], sizes = [2, 64], strides = [1, 1]} : vector<2x256xf32> to vector<2x64xf32>
    %121 = math.tanh %120 : vector<2x64xf32>
    %122 = vector.extract_strided_slice %119 {offsets = [0, 0], sizes = [2, 64], strides = [1, 1]} : vector<2x192xf32> to vector<2x64xf32>
    %123 = vector.extract_strided_slice %119 {offsets = [0, 64], sizes = [2, 64], strides = [1, 1]} : vector<2x192xf32> to vector<2x64xf32>
    %124 = vector.extract_strided_slice %119 {offsets = [0, 128], sizes = [2, 64], strides = [1, 1]} : vector<2x192xf32> to vector<2x64xf32>
    %125 = arith.mulf %123, %87 : vector<2x64xf32>
    %126 = arith.mulf %122, %121 : vector<2x64xf32>
    %127 = arith.addf %125, %126 : vector<2x64xf32>
    %128 = math.tanh %127 : vector<2x64xf32>
    %129 = arith.mulf %124, %128 : vector<2x64xf32>
    %130 = vector.extract_strided_slice %5 {offsets = [6, 0], sizes = [2, 256], strides = [1, 1]} : vector<16x256xf32> to vector<2x256xf32>
    %c0_32 = arith.constant 0 : index
    %c0_33 = arith.constant 0 : index
    %131 = vector.load %arg3[%c0_32, %c0_33] : memref<64x256xf32, #tpu.memory_space<vmem>>, vector<64x256xf32>
    %cst_34 = arith.constant dense<0.000000e+00> : vector<2x256xf32>
    %132 = tpu.matmul %109, %131, %cst_34 {dimension_numbers = #tpu.dot_dimension_numbers<[1], [0], [0], [1], [0, 0, 1, 1], [], []>} : vector<2x64xf32>, vector<64x256xf32>, vector<2x256xf32> -> vector<2x256xf32>
    %133 = arith.addf %130, %132 : vector<2x256xf32>
    %134 = vector.extract_strided_slice %133 {offsets = [0, 0], sizes = [2, 192], strides = [1, 1]} : vector<2x256xf32> to vector<2x192xf32>
    %135 = arith.negf %134 : vector<2x192xf32>
    %136 = math.exp %135 : vector<2x192xf32>
    %cst_35 = arith.constant 1.000000e+00 : f32
    %137 = vector.broadcast %cst_35 : f32 to vector<2x192xf32>
    %138 = arith.addf %137, %136 : vector<2x192xf32>
    %139 = arith.divf %137, %138 : vector<2x192xf32>
    %140 = vector.extract_strided_slice %133 {offsets = [0, 192], sizes = [2, 64], strides = [1, 1]} : vector<2x256xf32> to vector<2x64xf32>
    %141 = math.tanh %140 : vector<2x64xf32>
    %142 = vector.extract_strided_slice %139 {offsets = [0, 0], sizes = [2, 64], strides = [1, 1]} : vector<2x192xf32> to vector<2x64xf32>
    %143 = vector.extract_strided_slice %139 {offsets = [0, 64], sizes = [2, 64], strides = [1, 1]} : vector<2x192xf32> to vector<2x64xf32>
    %144 = vector.extract_strided_slice %139 {offsets = [0, 128], sizes = [2, 64], strides = [1, 1]} : vector<2x192xf32> to vector<2x64xf32>
    %145 = arith.mulf %143, %107 : vector<2x64xf32>
    %146 = arith.mulf %142, %141 : vector<2x64xf32>
    %147 = arith.addf %145, %146 : vector<2x64xf32>
    %148 = math.tanh %147 : vector<2x64xf32>
    %149 = arith.mulf %144, %148 : vector<2x64xf32>
    %150 = tpu.concatenate %149, %129 in 1 : vector<2x64xf32>, vector<2x64xf32> -> vector<2x128xf32>
    %c0_36 = arith.constant 0 : index
    %c0_37 = arith.constant 0 : index
    %151 = vector.load %arg4[%c0_36, %c0_37] : memref<128x256xf32, #tpu.memory_space<vmem>>, vector<128x256xf32>
    %cst_38 = arith.constant dense<0.000000e+00> : vector<2x256xf32>
    %152 = tpu.matmul %150, %151, %cst_38 {dimension_numbers = #tpu.dot_dimension_numbers<[1], [0], [0], [1], [0, 0, 1, 1], [], []>} : vector<2x128xf32>, vector<128x256xf32>, vector<2x256xf32> -> vector<2x256xf32>
    %153 = arith.addf %152, %8 : vector<2x256xf32>
    %154 = vector.extract_strided_slice %153 {offsets = [0, 0], sizes = [2, 192], strides = [1, 1]} : vector<2x256xf32> to vector<2x192xf32>
    %155 = arith.negf %154 : vector<2x192xf32>
    %156 = math.exp %155 : vector<2x192xf32>
    %cst_39 = arith.constant 1.000000e+00 : f32
    %157 = vector.broadcast %cst_39 : f32 to vector<2x192xf32>
    %158 = arith.addf %157, %156 : vector<2x192xf32>
    %159 = arith.divf %157, %158 : vector<2x192xf32>
    %160 = vector.extract_strided_slice %153 {offsets = [0, 192], sizes = [2, 64], strides = [1, 1]} : vector<2x256xf32> to vector<2x64xf32>
    %161 = math.tanh %160 : vector<2x64xf32>
    %162 = vector.extract_strided_slice %159 {offsets = [0, 0], sizes = [2, 64], strides = [1, 1]} : vector<2x192xf32> to vector<2x64xf32>
    %163 = vector.extract_strided_slice %159 {offsets = [0, 64], sizes = [2, 64], strides = [1, 1]} : vector<2x192xf32> to vector<2x64xf32>
    %164 = vector.extract_strided_slice %159 {offsets = [0, 128], sizes = [2, 64], strides = [1, 1]} : vector<2x192xf32> to vector<2x64xf32>
    %165 = arith.mulf %163, %127 : vector<2x64xf32>
    %166 = arith.mulf %162, %161 : vector<2x64xf32>
    %167 = arith.addf %165, %166 : vector<2x64xf32>
    %168 = math.tanh %167 : vector<2x64xf32>
    %169 = arith.mulf %164, %168 : vector<2x64xf32>
    %170 = vector.extract_strided_slice %5 {offsets = [8, 0], sizes = [2, 256], strides = [1, 1]} : vector<16x256xf32> to vector<2x256xf32>
    %c0_40 = arith.constant 0 : index
    %c0_41 = arith.constant 0 : index
    %171 = vector.load %arg3[%c0_40, %c0_41] : memref<64x256xf32, #tpu.memory_space<vmem>>, vector<64x256xf32>
    %cst_42 = arith.constant dense<0.000000e+00> : vector<2x256xf32>
    %172 = tpu.matmul %149, %171, %cst_42 {dimension_numbers = #tpu.dot_dimension_numbers<[1], [0], [0], [1], [0, 0, 1, 1], [], []>} : vector<2x64xf32>, vector<64x256xf32>, vector<2x256xf32> -> vector<2x256xf32>
    %173 = arith.addf %170, %172 : vector<2x256xf32>
    %174 = vector.extract_strided_slice %173 {offsets = [0, 0], sizes = [2, 192], strides = [1, 1]} : vector<2x256xf32> to vector<2x192xf32>
    %175 = arith.negf %174 : vector<2x192xf32>
    %176 = math.exp %175 : vector<2x192xf32>
    %cst_43 = arith.constant 1.000000e+00 : f32
    %177 = vector.broadcast %cst_43 : f32 to vector<2x192xf32>
    %178 = arith.addf %177, %176 : vector<2x192xf32>
    %179 = arith.divf %177, %178 : vector<2x192xf32>
    %180 = vector.extract_strided_slice %173 {offsets = [0, 192], sizes = [2, 64], strides = [1, 1]} : vector<2x256xf32> to vector<2x64xf32>
    %181 = math.tanh %180 : vector<2x64xf32>
    %182 = vector.extract_strided_slice %179 {offsets = [0, 0], sizes = [2, 64], strides = [1, 1]} : vector<2x192xf32> to vector<2x64xf32>
    %183 = vector.extract_strided_slice %179 {offsets = [0, 64], sizes = [2, 64], strides = [1, 1]} : vector<2x192xf32> to vector<2x64xf32>
    %184 = vector.extract_strided_slice %179 {offsets = [0, 128], sizes = [2, 64], strides = [1, 1]} : vector<2x192xf32> to vector<2x64xf32>
    %185 = arith.mulf %183, %147 : vector<2x64xf32>
    %186 = arith.mulf %182, %181 : vector<2x64xf32>
    %187 = arith.addf %185, %186 : vector<2x64xf32>
    %188 = math.tanh %187 : vector<2x64xf32>
    %189 = arith.mulf %184, %188 : vector<2x64xf32>
    %190 = tpu.concatenate %189, %169 in 1 : vector<2x64xf32>, vector<2x64xf32> -> vector<2x128xf32>
    %c0_44 = arith.constant 0 : index
    %c0_45 = arith.constant 0 : index
    %191 = vector.load %arg4[%c0_44, %c0_45] : memref<128x256xf32, #tpu.memory_space<vmem>>, vector<128x256xf32>
    %cst_46 = arith.constant dense<0.000000e+00> : vector<2x256xf32>
    %192 = tpu.matmul %190, %191, %cst_46 {dimension_numbers = #tpu.dot_dimension_numbers<[1], [0], [0], [1], [0, 0, 1, 1], [], []>} : vector<2x128xf32>, vector<128x256xf32>, vector<2x256xf32> -> vector<2x256xf32>
    %193 = arith.addf %192, %8 : vector<2x256xf32>
    %194 = vector.extract_strided_slice %193 {offsets = [0, 0], sizes = [2, 192], strides = [1, 1]} : vector<2x256xf32> to vector<2x192xf32>
    %195 = arith.negf %194 : vector<2x192xf32>
    %196 = math.exp %195 : vector<2x192xf32>
    %cst_47 = arith.constant 1.000000e+00 : f32
    %197 = vector.broadcast %cst_47 : f32 to vector<2x192xf32>
    %198 = arith.addf %197, %196 : vector<2x192xf32>
    %199 = arith.divf %197, %198 : vector<2x192xf32>
    %200 = vector.extract_strided_slice %193 {offsets = [0, 192], sizes = [2, 64], strides = [1, 1]} : vector<2x256xf32> to vector<2x64xf32>
    %201 = math.tanh %200 : vector<2x64xf32>
    %202 = vector.extract_strided_slice %199 {offsets = [0, 0], sizes = [2, 64], strides = [1, 1]} : vector<2x192xf32> to vector<2x64xf32>
    %203 = vector.extract_strided_slice %199 {offsets = [0, 64], sizes = [2, 64], strides = [1, 1]} : vector<2x192xf32> to vector<2x64xf32>
    %204 = vector.extract_strided_slice %199 {offsets = [0, 128], sizes = [2, 64], strides = [1, 1]} : vector<2x192xf32> to vector<2x64xf32>
    %205 = arith.mulf %203, %167 : vector<2x64xf32>
    %206 = arith.mulf %202, %201 : vector<2x64xf32>
    %207 = arith.addf %205, %206 : vector<2x64xf32>
    %208 = math.tanh %207 : vector<2x64xf32>
    %209 = arith.mulf %204, %208 : vector<2x64xf32>
    %210 = vector.extract_strided_slice %5 {offsets = [10, 0], sizes = [2, 256], strides = [1, 1]} : vector<16x256xf32> to vector<2x256xf32>
    %c0_48 = arith.constant 0 : index
    %c0_49 = arith.constant 0 : index
    %211 = vector.load %arg3[%c0_48, %c0_49] : memref<64x256xf32, #tpu.memory_space<vmem>>, vector<64x256xf32>
    %cst_50 = arith.constant dense<0.000000e+00> : vector<2x256xf32>
    %212 = tpu.matmul %189, %211, %cst_50 {dimension_numbers = #tpu.dot_dimension_numbers<[1], [0], [0], [1], [0, 0, 1, 1], [], []>} : vector<2x64xf32>, vector<64x256xf32>, vector<2x256xf32> -> vector<2x256xf32>
    %213 = arith.addf %210, %212 : vector<2x256xf32>
    %214 = vector.extract_strided_slice %213 {offsets = [0, 0], sizes = [2, 192], strides = [1, 1]} : vector<2x256xf32> to vector<2x192xf32>
    %215 = arith.negf %214 : vector<2x192xf32>
    %216 = math.exp %215 : vector<2x192xf32>
    %cst_51 = arith.constant 1.000000e+00 : f32
    %217 = vector.broadcast %cst_51 : f32 to vector<2x192xf32>
    %218 = arith.addf %217, %216 : vector<2x192xf32>
    %219 = arith.divf %217, %218 : vector<2x192xf32>
    %220 = vector.extract_strided_slice %213 {offsets = [0, 192], sizes = [2, 64], strides = [1, 1]} : vector<2x256xf32> to vector<2x64xf32>
    %221 = math.tanh %220 : vector<2x64xf32>
    %222 = vector.extract_strided_slice %219 {offsets = [0, 0], sizes = [2, 64], strides = [1, 1]} : vector<2x192xf32> to vector<2x64xf32>
    %223 = vector.extract_strided_slice %219 {offsets = [0, 64], sizes = [2, 64], strides = [1, 1]} : vector<2x192xf32> to vector<2x64xf32>
    %224 = vector.extract_strided_slice %219 {offsets = [0, 128], sizes = [2, 64], strides = [1, 1]} : vector<2x192xf32> to vector<2x64xf32>
    %225 = arith.mulf %223, %187 : vector<2x64xf32>
    %226 = arith.mulf %222, %221 : vector<2x64xf32>
    %227 = arith.addf %225, %226 : vector<2x64xf32>
    %228 = math.tanh %227 : vector<2x64xf32>
    %229 = arith.mulf %224, %228 : vector<2x64xf32>
    %230 = tpu.concatenate %229, %209 in 1 : vector<2x64xf32>, vector<2x64xf32> -> vector<2x128xf32>
    %c0_52 = arith.constant 0 : index
    %c0_53 = arith.constant 0 : index
    %231 = vector.load %arg4[%c0_52, %c0_53] : memref<128x256xf32, #tpu.memory_space<vmem>>, vector<128x256xf32>
    %cst_54 = arith.constant dense<0.000000e+00> : vector<2x256xf32>
    %232 = tpu.matmul %230, %231, %cst_54 {dimension_numbers = #tpu.dot_dimension_numbers<[1], [0], [0], [1], [0, 0, 1, 1], [], []>} : vector<2x128xf32>, vector<128x256xf32>, vector<2x256xf32> -> vector<2x256xf32>
    %233 = arith.addf %232, %8 : vector<2x256xf32>
    %234 = vector.extract_strided_slice %233 {offsets = [0, 0], sizes = [2, 192], strides = [1, 1]} : vector<2x256xf32> to vector<2x192xf32>
    %235 = arith.negf %234 : vector<2x192xf32>
    %236 = math.exp %235 : vector<2x192xf32>
    %cst_55 = arith.constant 1.000000e+00 : f32
    %237 = vector.broadcast %cst_55 : f32 to vector<2x192xf32>
    %238 = arith.addf %237, %236 : vector<2x192xf32>
    %239 = arith.divf %237, %238 : vector<2x192xf32>
    %240 = vector.extract_strided_slice %233 {offsets = [0, 192], sizes = [2, 64], strides = [1, 1]} : vector<2x256xf32> to vector<2x64xf32>
    %241 = math.tanh %240 : vector<2x64xf32>
    %242 = vector.extract_strided_slice %239 {offsets = [0, 0], sizes = [2, 64], strides = [1, 1]} : vector<2x192xf32> to vector<2x64xf32>
    %243 = vector.extract_strided_slice %239 {offsets = [0, 64], sizes = [2, 64], strides = [1, 1]} : vector<2x192xf32> to vector<2x64xf32>
    %244 = vector.extract_strided_slice %239 {offsets = [0, 128], sizes = [2, 64], strides = [1, 1]} : vector<2x192xf32> to vector<2x64xf32>
    %245 = arith.mulf %243, %207 : vector<2x64xf32>
    %246 = arith.mulf %242, %241 : vector<2x64xf32>
    %247 = arith.addf %245, %246 : vector<2x64xf32>
    %248 = math.tanh %247 : vector<2x64xf32>
    %249 = arith.mulf %244, %248 : vector<2x64xf32>
    %250 = vector.extract_strided_slice %5 {offsets = [12, 0], sizes = [2, 256], strides = [1, 1]} : vector<16x256xf32> to vector<2x256xf32>
    %c0_56 = arith.constant 0 : index
    %c0_57 = arith.constant 0 : index
    %251 = vector.load %arg3[%c0_56, %c0_57] : memref<64x256xf32, #tpu.memory_space<vmem>>, vector<64x256xf32>
    %cst_58 = arith.constant dense<0.000000e+00> : vector<2x256xf32>
    %252 = tpu.matmul %229, %251, %cst_58 {dimension_numbers = #tpu.dot_dimension_numbers<[1], [0], [0], [1], [0, 0, 1, 1], [], []>} : vector<2x64xf32>, vector<64x256xf32>, vector<2x256xf32> -> vector<2x256xf32>
    %253 = arith.addf %250, %252 : vector<2x256xf32>
    %254 = vector.extract_strided_slice %253 {offsets = [0, 0], sizes = [2, 192], strides = [1, 1]} : vector<2x256xf32> to vector<2x192xf32>
    %255 = arith.negf %254 : vector<2x192xf32>
    %256 = math.exp %255 : vector<2x192xf32>
    %cst_59 = arith.constant 1.000000e+00 : f32
    %257 = vector.broadcast %cst_59 : f32 to vector<2x192xf32>
    %258 = arith.addf %257, %256 : vector<2x192xf32>
    %259 = arith.divf %257, %258 : vector<2x192xf32>
    %260 = vector.extract_strided_slice %253 {offsets = [0, 192], sizes = [2, 64], strides = [1, 1]} : vector<2x256xf32> to vector<2x64xf32>
    %261 = math.tanh %260 : vector<2x64xf32>
    %262 = vector.extract_strided_slice %259 {offsets = [0, 0], sizes = [2, 64], strides = [1, 1]} : vector<2x192xf32> to vector<2x64xf32>
    %263 = vector.extract_strided_slice %259 {offsets = [0, 64], sizes = [2, 64], strides = [1, 1]} : vector<2x192xf32> to vector<2x64xf32>
    %264 = vector.extract_strided_slice %259 {offsets = [0, 128], sizes = [2, 64], strides = [1, 1]} : vector<2x192xf32> to vector<2x64xf32>
    %265 = arith.mulf %263, %227 : vector<2x64xf32>
    %266 = arith.mulf %262, %261 : vector<2x64xf32>
    %267 = arith.addf %265, %266 : vector<2x64xf32>
    %268 = math.tanh %267 : vector<2x64xf32>
    %269 = arith.mulf %264, %268 : vector<2x64xf32>
    %270 = tpu.concatenate %269, %249 in 1 : vector<2x64xf32>, vector<2x64xf32> -> vector<2x128xf32>
    %c0_60 = arith.constant 0 : index
    %c0_61 = arith.constant 0 : index
    %271 = vector.load %arg4[%c0_60, %c0_61] : memref<128x256xf32, #tpu.memory_space<vmem>>, vector<128x256xf32>
    %cst_62 = arith.constant dense<0.000000e+00> : vector<2x256xf32>
    %272 = tpu.matmul %270, %271, %cst_62 {dimension_numbers = #tpu.dot_dimension_numbers<[1], [0], [0], [1], [0, 0, 1, 1], [], []>} : vector<2x128xf32>, vector<128x256xf32>, vector<2x256xf32> -> vector<2x256xf32>
    %273 = arith.addf %272, %8 : vector<2x256xf32>
    %274 = vector.extract_strided_slice %273 {offsets = [0, 0], sizes = [2, 192], strides = [1, 1]} : vector<2x256xf32> to vector<2x192xf32>
    %275 = arith.negf %274 : vector<2x192xf32>
    %276 = math.exp %275 : vector<2x192xf32>
    %cst_63 = arith.constant 1.000000e+00 : f32
    %277 = vector.broadcast %cst_63 : f32 to vector<2x192xf32>
    %278 = arith.addf %277, %276 : vector<2x192xf32>
    %279 = arith.divf %277, %278 : vector<2x192xf32>
    %280 = vector.extract_strided_slice %273 {offsets = [0, 192], sizes = [2, 64], strides = [1, 1]} : vector<2x256xf32> to vector<2x64xf32>
    %281 = math.tanh %280 : vector<2x64xf32>
    %282 = vector.extract_strided_slice %279 {offsets = [0, 0], sizes = [2, 64], strides = [1, 1]} : vector<2x192xf32> to vector<2x64xf32>
    %283 = vector.extract_strided_slice %279 {offsets = [0, 64], sizes = [2, 64], strides = [1, 1]} : vector<2x192xf32> to vector<2x64xf32>
    %284 = vector.extract_strided_slice %279 {offsets = [0, 128], sizes = [2, 64], strides = [1, 1]} : vector<2x192xf32> to vector<2x64xf32>
    %285 = arith.mulf %283, %247 : vector<2x64xf32>
    %286 = arith.mulf %282, %281 : vector<2x64xf32>
    %287 = arith.addf %285, %286 : vector<2x64xf32>
    %288 = math.tanh %287 : vector<2x64xf32>
    %289 = arith.mulf %284, %288 : vector<2x64xf32>
    %290 = vector.extract_strided_slice %5 {offsets = [14, 0], sizes = [2, 256], strides = [1, 1]} : vector<16x256xf32> to vector<2x256xf32>
    %c0_64 = arith.constant 0 : index
    %c0_65 = arith.constant 0 : index
    %291 = vector.load %arg3[%c0_64, %c0_65] : memref<64x256xf32, #tpu.memory_space<vmem>>, vector<64x256xf32>
    %cst_66 = arith.constant dense<0.000000e+00> : vector<2x256xf32>
    %292 = tpu.matmul %269, %291, %cst_66 {dimension_numbers = #tpu.dot_dimension_numbers<[1], [0], [0], [1], [0, 0, 1, 1], [], []>} : vector<2x64xf32>, vector<64x256xf32>, vector<2x256xf32> -> vector<2x256xf32>
    %293 = arith.addf %290, %292 : vector<2x256xf32>
    %294 = vector.extract_strided_slice %293 {offsets = [0, 0], sizes = [2, 192], strides = [1, 1]} : vector<2x256xf32> to vector<2x192xf32>
    %295 = arith.negf %294 : vector<2x192xf32>
    %296 = math.exp %295 : vector<2x192xf32>
    %cst_67 = arith.constant 1.000000e+00 : f32
    %297 = vector.broadcast %cst_67 : f32 to vector<2x192xf32>
    %298 = arith.addf %297, %296 : vector<2x192xf32>
    %299 = arith.divf %297, %298 : vector<2x192xf32>
    %300 = vector.extract_strided_slice %293 {offsets = [0, 192], sizes = [2, 64], strides = [1, 1]} : vector<2x256xf32> to vector<2x64xf32>
    %301 = math.tanh %300 : vector<2x64xf32>
    %302 = vector.extract_strided_slice %299 {offsets = [0, 0], sizes = [2, 64], strides = [1, 1]} : vector<2x192xf32> to vector<2x64xf32>
    %303 = vector.extract_strided_slice %299 {offsets = [0, 64], sizes = [2, 64], strides = [1, 1]} : vector<2x192xf32> to vector<2x64xf32>
    %304 = vector.extract_strided_slice %299 {offsets = [0, 128], sizes = [2, 64], strides = [1, 1]} : vector<2x192xf32> to vector<2x64xf32>
    %305 = arith.mulf %303, %267 : vector<2x64xf32>
    %306 = arith.mulf %302, %301 : vector<2x64xf32>
    %307 = arith.addf %305, %306 : vector<2x64xf32>
    %308 = math.tanh %307 : vector<2x64xf32>
    %309 = arith.mulf %304, %308 : vector<2x64xf32>
    %310 = tpu.concatenate %309, %289 in 1 : vector<2x64xf32>, vector<2x64xf32> -> vector<2x128xf32>
    %c0_68 = arith.constant 0 : index
    %c0_69 = arith.constant 0 : index
    %311 = vector.load %arg4[%c0_68, %c0_69] : memref<128x256xf32, #tpu.memory_space<vmem>>, vector<128x256xf32>
    %cst_70 = arith.constant dense<0.000000e+00> : vector<2x256xf32>
    %312 = tpu.matmul %310, %311, %cst_70 {dimension_numbers = #tpu.dot_dimension_numbers<[1], [0], [0], [1], [0, 0, 1, 1], [], []>} : vector<2x128xf32>, vector<128x256xf32>, vector<2x256xf32> -> vector<2x256xf32>
    %313 = arith.addf %312, %8 : vector<2x256xf32>
    %314 = vector.extract_strided_slice %313 {offsets = [0, 0], sizes = [2, 192], strides = [1, 1]} : vector<2x256xf32> to vector<2x192xf32>
    %315 = arith.negf %314 : vector<2x192xf32>
    %316 = math.exp %315 : vector<2x192xf32>
    %cst_71 = arith.constant 1.000000e+00 : f32
    %317 = vector.broadcast %cst_71 : f32 to vector<2x192xf32>
    %318 = arith.addf %317, %316 : vector<2x192xf32>
    %319 = arith.divf %317, %318 : vector<2x192xf32>
    %320 = vector.extract_strided_slice %313 {offsets = [0, 192], sizes = [2, 64], strides = [1, 1]} : vector<2x256xf32> to vector<2x64xf32>
    %321 = math.tanh %320 : vector<2x64xf32>
    %322 = vector.extract_strided_slice %319 {offsets = [0, 0], sizes = [2, 64], strides = [1, 1]} : vector<2x192xf32> to vector<2x64xf32>
    %323 = vector.extract_strided_slice %319 {offsets = [0, 64], sizes = [2, 64], strides = [1, 1]} : vector<2x192xf32> to vector<2x64xf32>
    %324 = vector.extract_strided_slice %319 {offsets = [0, 128], sizes = [2, 64], strides = [1, 1]} : vector<2x192xf32> to vector<2x64xf32>
    %325 = arith.mulf %323, %287 : vector<2x64xf32>
    %326 = arith.mulf %322, %321 : vector<2x64xf32>
    %327 = arith.addf %325, %326 : vector<2x64xf32>
    %328 = math.tanh %327 : vector<2x64xf32>
    %329 = arith.mulf %324, %328 : vector<2x64xf32>
    %c0_72 = arith.constant 0 : index
    %c0_73 = arith.constant 0 : index
    %330 = vector.load %arg6[%c0_72, %c0_73] : memref<1x64xf32, #tpu.memory_space<vmem>>, vector<1x64xf32>
    %331 = vector.broadcast %330 : vector<1x64xf32> to vector<2x64xf32>
    %332 = arith.mulf %329, %331 : vector<2x64xf32>
    %cst_74 = arith.constant dense<0.000000e+00> : vector<2xf32>
    %333 = vector.multi_reduction <add>, %332, %cst_74 [1] : vector<2x64xf32> to vector<2xf32>
    %334 = vector.shape_cast %333 : vector<2xf32> to vector<2x1xf32>
    %c0_75 = arith.constant 0 : index
    %c0_76 = arith.constant 0 : index
    %335 = vector.load %arg7[%c0_75, %c0_76] : memref<1x1xf32, #tpu.memory_space<vmem>>, vector<1x1xf32>
    %336 = vector.broadcast %335 : vector<1x1xf32> to vector<2x1xf32>
    %337 = arith.addf %334, %336 : vector<2x1xf32>
    %c0_77 = arith.constant 0 : index
    %c0_78 = arith.constant 0 : index
    %338 = vector.load %arg8[%c0_77, %c0_78] : memref<2x1xf32, #tpu.memory_space<vmem>>, vector<2x1xf32>
    tpu.vector_store %arg8[%c0_77, %c0_78], %337 {strides = array<i32>} : memref<2x1xf32, #tpu.memory_space<vmem>>, vector<2x1xf32>,
    return
  }
}

</mosaic_0001>

<llo_original>
// kernel: lstm_model_forward.1
$region0: #{lstm_model_forward.1}
  #allocation0 [shape = 'u32[]', space=smem, size = 0x4, offset = 0x4, fixed_abs, tag = 'smem constant byte address 0x4 - core index']
  #allocation1 [shape = 'u32[72,128]{1,0:T(1,128)}', space=vmem, size = 0x9000, scoped, tag = 'internal scratch']
  #allocation2 [shape = 'f32[1,1]{1,0:T(1,128)S(1)}', space=vmem, size = 0x200, scoped, tag = 'scoped memory for lstm_model_forward.1']
  %s0 = inlined_call_operand.vmem [shape: f32[16,6], index: 0, kind: input, shape index: {}]
  %s1 = inlined_call_operand.vmem [shape: f32[6,256], index: 1, kind: input, shape index: {}]
  %s2 = inlined_call_operand.vmem [shape: f32[1,256], index: 2, kind: input, shape index: {}]
  %s3 = inlined_call_operand.hbm [shape: f32[64,256], index: 3, kind: input, shape index: {}]
  %s4 = inlined_call_operand.hbm [shape: f32[128,256], index: 4, kind: input, shape index: {}]
  %s5 = inlined_call_operand.vmem [shape: f32[1,256], index: 5, kind: input, shape index: {}]
  %s6 = inlined_call_operand.vmem [shape: f32[1,64], index: 6, kind: input, shape index: {}]
  %s7 = inlined_call_operand.<no memory space> [shape: f32[1,1], index: 7, kind: input, shape index: {}]
  %s8 = inlined_call_operand.vmem [shape: f32[2,1], index: 8, kind: output, shape index: {}]
  %s9 = sld [smem:[#allocation0]]
  $region50: #{lstm_model_forward.1} parent=0
    _
  %s11 = ssub.s32 1, %s9
  %s12 = scalar_select 0, %s11, %s9
  %v13 = vstv %s7
  %14 = vst [vmem:[#allocation2] sm:$0x1] %v13
  $region1: #{lstm_model_forward.1} parent=0
    #allocation3 [shape = 'u8[65536]{0}', space=vmem, size = 0x10000, scoped, tag = 'input window, operand 3, single buffered']
    #allocation4 [shape = 's32[1]{0}', space=sflag, size = 0x4, scoped, tag = 'scoped memory for lstm_model_forward.1']
    #allocation5 [shape = 'u8[131072]{0}', space=vmem, size = 0x20000, scoped, tag = 'input window, operand 4, single buffered']
    #allocation6 [shape = 's32[1]{0}', space=sflag, size = 0x4, scoped, tag = 'scoped memory for lstm_model_forward.1']
    %15 = vsyncpa [#allocation4], 0
    %16 = vsyncpa [#allocation6], 0
    // Predicated region
    $region2: #{lstm_model_forward.1} parent=1 // pred_check
      _
    $region3: #{lstm_model_forward.1} parent=1 // pred_check_branch
      %18 = sbr.rel (0) target = $region5
    $region4: #{lstm_model_forward.1} parent=1 // pred_region
      _
    $region5: #{lstm_model_forward.1} parent=1 // pred_fallthru
      _
    // Predicated region
    $region6: #{lstm_model_forward.1} parent=1 // pred_check
      _
    $region7: #{lstm_model_forward.1} parent=1 // pred_check_branch
      %20 = sbr.rel (0) target = $region9
    $region8: #{lstm_model_forward.1} parent=1 // pred_region
      _
    $region9: #{lstm_model_forward.1} parent=1 // pred_fallthru
      _
    // Predicated region
    $region10: #{lstm_model_forward.1} parent=1 // pred_check
      _
    $region11: #{lstm_model_forward.1} parent=1 // pred_check_branch
      %22 = sbr.rel (0) target = $region13
    $region12: #{lstm_model_forward.1} parent=1 // pred_region
      _
    $region13: #{lstm_model_forward.1} parent=1 // pred_fallthru
      _
    // Predicated region
    $region14: #{lstm_model_forward.1} parent=1 // pred_check
      _
    $region15: #{lstm_model_forward.1} parent=1 // pred_check_branch
      %24 = sbr.rel (0) target = $region17
    $region16: #{lstm_model_forward.1} parent=1 // pred_region
      %26 = vsyncadd [#allocation4], 0
      %s27 = sshll.u32 %s3, 4
      %s28 = int_to_ptr.hbm [resolvable:$true] %s27
      %s29 = sshll.u32 [#allocation3], 4
      %s30 = int_to_ptr.vmem [resolvable:$true] %s29
      %35 = dma.hbm_to_vmem [thread:$0]  %s28, 2048, %s30, [#allocation4], 256, 256, 16
    $region17: #{lstm_model_forward.1} parent=1 // pred_fallthru
      _
    // Predicated region
    $region18: #{lstm_model_forward.1} parent=1 // pred_check
      _
    $region19: #{lstm_model_forward.1} parent=1 // pred_check_branch
      %37 = sbr.rel (0) target = $region21
    $region20: #{lstm_model_forward.1} parent=1 // pred_region
      %39 = vsyncadd [#allocation6], 0
      %s40 = sshll.u32 %s4, 4
      %s41 = int_to_ptr.hbm [resolvable:$true] %s40
      %s42 = sshll.u32 [#allocation5], 4
      %s43 = int_to_ptr.vmem [resolvable:$true] %s42
      %48 = dma.hbm_to_vmem [thread:$0]  %s41, 4096, %s43, [#allocation6], 256, 256, 16
    $region21: #{lstm_model_forward.1} parent=1 // pred_fallthru
      _
    // Predicated region
    $region22: #{lstm_model_forward.1} parent=1 // pred_check
      _
    $region23: #{lstm_model_forward.1} parent=1 // pred_check_branch
      %50 = sbr.rel (0) target = $region25
    $region24: #{lstm_model_forward.1} parent=1 // pred_region
      _
    $region25: #{lstm_model_forward.1} parent=1 // pred_fallthru
      _
    // Predicated region
    $region26: #{lstm_model_forward.1} parent=1 // pred_check
      _
    $region27: #{lstm_model_forward.1} parent=1 // pred_check_branch
      %52 = sbr.rel (0) target = $region29
    $region28: #{lstm_model_forward.1} parent=1 // pred_region
      _
    $region29: #{lstm_model_forward.1} parent=1 // pred_fallthru
      _
    // Predicated region
    $region30: #{lstm_model_forward.1} parent=1 // pred_check
      _
    $region31: #{lstm_model_forward.1} parent=1 // pred_check_branch
      %54 = sbr.rel (0) target = $region33
    $region32: #{lstm_model_forward.1} parent=1 // pred_region
      _
    $region33: #{lstm_model_forward.1} parent=1 // pred_fallthru
      _
    // Predicated region
    $region34: #{lstm_model_forward.1} parent=1 // pred_check
      _
    $region35: #{lstm_model_forward.1} parent=1 // pred_check_branch
      %56 = sbr.rel (0) target = $region37
    $region36: #{lstm_model_forward.1} parent=1 // pred_region
      %58 = dma.done [#allocation4], 2048
    $region37: #{lstm_model_forward.1} parent=1 // pred_fallthru
      _
    // Predicated region
    $region38: #{lstm_model_forward.1} parent=1 // pred_check
      _
    $region39: #{lstm_model_forward.1} parent=1 // pred_check_branch
      %60 = sbr.rel (0) target = $region41
    $region40: #{lstm_model_forward.1} parent=1 // pred_region
      %62 = dma.done [#allocation6], 4096
    $region41: #{lstm_model_forward.1} parent=1 // pred_fallthru
      _
    %v63 = vld [vmem:[%s0] sm:$0xff]
    %v64 = vld [vmem:[%s0 + $0x8] sm:$0xff]
    %v65 = vld [vmem:[%s1] sm:$0x3f]
    %v66 = vld [vmem:[%s1 + $0x8] sm:$0x3f]
    %v67 = vld [vmem:[%s2] sm:$0x3]
    %v69 = vperm.slane %v67, 0
    %v70 = vperm.slane %v67, 1
    %vm73 = vcmask 48128
    %v75 = vsel %vm73, %v63, 0
    %v78 = vsel %vm73, %v64, 0
    %vm80 = vcmask 1045504
    %v82 = vsel %vm80, %v65, 0
    %v85 = vsel %vm80, %v66, 0
    %87 = vmatpush.msra.mxu0 0.0
    %88 = vmatpush.msra.mxu0 0.0
    %89 = vmatpush.msra.mxu0 0.0
    %90 = vmatpush.msra.mxu0 0.0
    %91 = vmatpush.msra.mxu0 0.0
    %92 = vmatpush.msra.mxu0 0.0
    %93 = vmatpush.msra.mxu0 0.0
    %94 = vmatpush.msra.mxu0 0.0
    %95 = vmatpush.msra.mxu0 0.0
    %96 = vmatpush.msra.mxu0 0.0
    %97 = vmatpush.msra.mxu0 0.0
    %98 = vmatpush.msra.mxu0 0.0
    %99 = vmatpush.msra.mxu0 0.0
    %100 = vmatpush.msra.mxu0 0.0
    %101 = vmatpush.msra.mxu0 0.0
    %102 = vmatpush.msra.mxu0 %v82
    %103 = vmatmul.f32.gmra.mxu0 %v75
    %v104 = vpop.f32.mrf.mxu0
    %v105 = vadd.f32 %v69, %v104
    %106 = vmatmul.f32.gmra.mxu0 %v78
    %v107 = vpop.f32.mrf.mxu0
    %v108 = vadd.f32 %v69, %v107
    %109 = vdwg.mxu0
    %110 = vmatpush.msra.mxu0 0.0
    %111 = vmatpush.msra.mxu0 0.0
    %112 = vmatpush.msra.mxu0 0.0
    %113 = vmatpush.msra.mxu0 0.0
    %114 = vmatpush.msra.mxu0 0.0
    %115 = vmatpush.msra.mxu0 0.0
    %116 = vmatpush.msra.mxu0 0.0
    %117 = vmatpush.msra.mxu0 0.0
    %118 = vmatpush.msra.mxu0 0.0
    %119 = vmatpush.msra.mxu0 0.0
    %120 = vmatpush.msra.mxu0 0.0
    %121 = vmatpush.msra.mxu0 0.0
    %122 = vmatpush.msra.mxu0 0.0
    %123 = vmatpush.msra.mxu0 0.0
    %124 = vmatpush.msra.mxu0 0.0
    %125 = vmatpush.msra.mxu0 %v85
    %126 = vmatmul.f32.gmra.mxu0 %v75
    %v127 = vpop.f32.mrf.mxu0
    %v128 = vadd.f32 %v70, %v127
    %129 = vmatmul.f32.gmra.mxu0 %v78
    %v130 = vpop.f32.mrf.mxu0
    %v131 = vadd.f32 %v70, %v130
    %132 = vdwg.mxu0
    %v133 = vld [vmem:[%s5] sm:$0x3]
    %v135 = vperm.slane %v133, 0
    %v136 = vperm.slane %v133, 1
    %v139 = vld [vmem:[#allocation3] sm:$0xff]
    %v140 = vld [vmem:[#allocation3 + $0x8] sm:$0xff]
    %v141 = vld [vmem:[#allocation3 + $0x10] sm:$0xff]
    %v142 = vld [vmem:[#allocation3 + $0x18] sm:$0xff]
    %v143 = vld [vmem:[#allocation3 + $0x20] sm:$0xff]
    %v144 = vld [vmem:[#allocation3 + $0x28] sm:$0xff]
    %v145 = vld [vmem:[#allocation3 + $0x30] sm:$0xff]
    %v146 = vld [vmem:[#allocation3 + $0x38] sm:$0xff]
    %v147 = vld [vmem:[#allocation3 + $0x40] sm:$0xff]
    %v148 = vld [vmem:[#allocation3 + $0x48] sm:$0xff]
    %v149 = vld [vmem:[#allocation3 + $0x50] sm:$0xff]
    %v150 = vld [vmem:[#allocation3 + $0x58] sm:$0xff]
    %v151 = vld [vmem:[#allocation3 + $0x60] sm:$0xff]
    %v152 = vld [vmem:[#allocation3 + $0x68] sm:$0xff]
    %v153 = vld [vmem:[#allocation3 + $0x70] sm:$0xff]
    %v154 = vld [vmem:[#allocation3 + $0x78] sm:$0xff]
    %vm155 = vcmask 523264
    %v157 = vsel %vm155, 0.0, 0
    %159 = vmatpush.msra.mxu0 0.0
    %160 = vmatpush.msra.mxu0 0.0
    %161 = vmatpush.msra.mxu0 0.0
    %162 = vmatpush.msra.mxu0 0.0
    %163 = vmatpush.msra.mxu0 0.0
    %164 = vmatpush.msra.mxu0 0.0
    %165 = vmatpush.msra.mxu0 0.0
    %166 = vmatpush.msra.mxu0 0.0
    %167 = vmatpush.msra.mxu0 %v153
    %168 = vmatpush.msra.mxu0 %v151
    %169 = vmatpush.msra.mxu0 %v149
    %170 = vmatpush.msra.mxu0 %v147
    %171 = vmatpush.msra.mxu0 %v145
    %172 = vmatpush.msra.mxu0 %v143
    %173 = vmatpush.msra.mxu0 %v141
    %174 = vmatpush.msra.mxu0 %v139
    %175 = vmatmul.f32.gmra.mxu0 %v157
    %v176 = vpop.f32.mrf.mxu0
    %v177 = vadd.f32 0.0, %v176
    %178 = vdwg.mxu0
    %179 = vmatpush.msra.mxu0 0.0
    %180 = vmatpush.msra.mxu0 0.0
    %181 = vmatpush.msra.mxu0 0.0
    %182 = vmatpush.msra.mxu0 0.0
    %183 = vmatpush.msra.mxu0 0.0
    %184 = vmatpush.msra.mxu0 0.0
    %185 = vmatpush.msra.mxu0 0.0
    %186 = vmatpush.msra.mxu0 0.0
    %187 = vmatpush.msra.mxu0 %v154
    %188 = vmatpush.msra.mxu0 %v152
    %189 = vmatpush.msra.mxu0 %v150
    %190 = vmatpush.msra.mxu0 %v148
    %191 = vmatpush.msra.mxu0 %v146
    %192 = vmatpush.msra.mxu0 %v144
    %193 = vmatpush.msra.mxu0 %v142
    %194 = vmatpush.msra.mxu0 %v140
    %195 = vmatmul.f32.gmra.mxu0 %v157
    %v196 = vpop.f32.mrf.mxu0
    %v197 = vadd.f32 0.0, %v196
    %198 = vdwg.mxu0
    %v199 = vadd.f32 %v105, %v177
    %v200 = vadd.f32 %v128, %v197
    %v201 = vxor.u32 %v199, 2147483648
    %v202 = vxor.u32 %v200, 2147483648
    %v203 = vmul.f32 %v201, 1.442695
    %v204 = vpow.pop %v203
    %v205 = vmul.f32 %v202, 1.442695
    %v206 = vpow.pop %v205
    %v207 = vadd.f32 %v204, 1.0
    %v208 = vadd.f32 %v206, 1.0
    %v209 = vrcp.pop %v207
    %v210 = vmul.f32 %v207, %v209
    %v211 = vsub.f32 1.0, %v210
    %v212 = vmul.f32 %v209, %v211
    %v213 = vadd.f32 %v209, %v212
    %vm214 = vweird.f32 %v207
    %vm215 = vweird.f32 %v209
    %vm216 = vmor %vm214, %vm215
    %v217 = vsel %vm216, %v209, %v213
    %v218 = vand.u32 2147483647, %v207
    %vm219 = vcmp.eq.f32.partialorder %v218, 8.507059e+37
    %v220 = vand.u32 %v207, 2147483648
    %v221 = vor.u32 1.1754944e-38, %v220
    %v222 = vsel %vm219, %v221, %v217
    %v223 = vmul.f32 1.0, %v222
    %v224 = vrcp.pop %v208
    %v225 = vmul.f32 %v208, %v224
    %v226 = vsub.f32 1.0, %v225
    %v227 = vmul.f32 %v224, %v226
    %v228 = vadd.f32 %v224, %v227
    %vm229 = vweird.f32 %v208
    %vm230 = vweird.f32 %v224
    %vm231 = vmor %vm229, %vm230
    %v232 = vsel %vm231, %v224, %v228
    %v233 = vand.u32 2147483647, %v208
    %vm234 = vcmp.eq.f32.partialorder %v233, 8.507059e+37
    %v235 = vand.u32 %v208, 2147483648
    %v236 = vor.u32 1.1754944e-38, %v235
    %v237 = vsel %vm234, %v236, %v232
    %v238 = vmul.f32 1.0, %v237
    %v239 = vtanh.pop %v200
    %v240 = vmul.f32 %v223, 0.0
    %242 = vrot.lane.b32.xlu0 %v239, 64
    %v243 = vpop.permute.xlu0 %242
    %v245 = vmul.f32 %v223, %v243
    %247 = vrot.lane.b32.xlu0 %v245, 64
    %v248 = vpop.permute.xlu0 %247
    %v250 = vadd.f32 %v240, %v248
    %v251 = vtanh.pop %v250
    %253 = vrot.lane.b32.xlu0 %v251, 64
    %v254 = vpop.permute.xlu0 %253
    %v256 = vmul.f32 %v238, %v254
    %v257 = vsel %vm155, %v256, 0.0
    %v258 = vld [vmem:[#allocation5] sm:$0xff]
    %v259 = vld [vmem:[#allocation5 + $0x8] sm:$0xff]
    %v260 = vld [vmem:[#allocation5 + $0x10] sm:$0xff]
    %v261 = vld [vmem:[#allocation5 + $0x18] sm:$0xff]
    %v262 = vld [vmem:[#allocation5 + $0x20] sm:$0xff]
    %v263 = vld [vmem:[#allocation5 + $0x28] sm:$0xff]
    %v264 = vld [vmem:[#allocation5 + $0x30] sm:$0xff]
    %v265 = vld [vmem:[#allocation5 + $0x38] sm:$0xff]
    %v266 = vld [vmem:[#allocation5 + $0x40] sm:$0xff]
    %v267 = vld [vmem:[#allocation5 + $0x48] sm:$0xff]
    %v268 = vld [vmem:[#allocation5 + $0x50] sm:$0xff]
    %v269 = vld [vmem:[#allocation5 + $0x58] sm:$0xff]
    %v270 = vld [vmem:[#allocation5 + $0x60] sm:$0xff]
    %v271 = vld [vmem:[#allocation5 + $0x68] sm:$0xff]
    %v272 = vld [vmem:[#allocation5 + $0x70] sm:$0xff]
    %v273 = vld [vmem:[#allocation5 + $0x78] sm:$0xff]
    %v274 = vld [vmem:[#allocation5 + $0x80] sm:$0xff]
    %v275 = vld [vmem:[#allocation5 + $0x88] sm:$0xff]
    %v276 = vld [vmem:[#allocation5 + $0x90] sm:$0xff]
    %v277 = vld [vmem:[#allocation5 + $0x98] sm:$0xff]
    %v278 = vld [vmem:[#allocation5 + $0xa0] sm:$0xff]
    %v279 = vld [vmem:[#allocation5 + $0xa8] sm:$0xff]
    %v280 = vld [vmem:[#allocation5 + $0xb0] sm:$0xff]
    %v281 = vld [vmem:[#allocation5 + $0xb8] sm:$0xff]
    %v282 = vld [vmem:[#allocation5 + $0xc0] sm:$0xff]
    %v283 = vld [vmem:[#allocation5 + $0xc8] sm:$0xff]
    %v284 = vld [vmem:[#allocation5 + $0xd0] sm:$0xff]
    %v285 = vld [vmem:[#allocation5 + $0xd8] sm:$0xff]
    %v286 = vld [vmem:[#allocation5 + $0xe0] sm:$0xff]
    %v287 = vld [vmem:[#allocation5 + $0xe8] sm:$0xff]
    %v288 = vld [vmem:[#allocation5 + $0xf0] sm:$0xff]
    %v289 = vld [vmem:[#allocation5 + $0xf8] sm:$0xff]
    %290 = vmatpush.msra.mxu0 %v288
    %291 = vmatpush.msra.mxu0 %v286
    %292 = vmatpush.msra.mxu0 %v284
    %293 = vmatpush.msra.mxu0 %v282
    %294 = vmatpush.msra.mxu0 %v280
    %295 = vmatpush.msra.mxu0 %v278
    %296 = vmatpush.msra.mxu0 %v276
    %297 = vmatpush.msra.mxu0 %v274
    %298 = vmatpush.msra.mxu0 %v272
    %299 = vmatpush.msra.mxu0 %v270
    %300 = vmatpush.msra.mxu0 %v268
    %301 = vmatpush.msra.mxu0 %v266
    %302 = vmatpush.msra.mxu0 %v264
    %303 = vmatpush.msra.mxu0 %v262
    %304 = vmatpush.msra.mxu0 %v260
    %305 = vmatpush.msra.mxu0 %v258
    %306 = vmatmul.f32.gmra.mxu0 %v257
    %v307 = vpop.f32.mrf.mxu0
    %v308 = vadd.f32 %v135, %v307
    %309 = vdwg.mxu0
    %310 = vmatpush.msra.mxu0 %v289
    %311 = vmatpush.msra.mxu0 %v287
    %312 = vmatpush.msra.mxu0 %v285
    %313 = vmatpush.msra.mxu0 %v283
    %314 = vmatpush.msra.mxu0 %v281
    %315 = vmatpush.msra.mxu0 %v279
    %316 = vmatpush.msra.mxu0 %v277
    %317 = vmatpush.msra.mxu0 %v275
    %318 = vmatpush.msra.mxu0 %v273
    %319 = vmatpush.msra.mxu0 %v271
    %320 = vmatpush.msra.mxu0 %v269
    %321 = vmatpush.msra.mxu0 %v267
    %322 = vmatpush.msra.mxu0 %v265
    %323 = vmatpush.msra.mxu0 %v263
    %324 = vmatpush.msra.mxu0 %v261
    %325 = vmatpush.msra.mxu0 %v259
    %326 = vmatmul.f32.gmra.mxu0 %v257
    %v327 = vpop.f32.mrf.mxu0
    %v328 = vadd.f32 %v136, %v327
    %329 = vdwg.mxu0
    %v330 = vxor.u32 %v308, 2147483648
    %v331 = vxor.u32 %v328, 2147483648
    %v332 = vmul.f32 %v330, 1.442695
    %v333 = vpow.pop %v332
    %v334 = vmul.f32 %v331, 1.442695
    %v335 = vpow.pop %v334
    %v336 = vadd.f32 %v333, 1.0
    %v337 = vadd.f32 %v335, 1.0
    %v338 = vrcp.pop %v336
    %v339 = vmul.f32 %v336, %v338
    %v340 = vsub.f32 1.0, %v339
    %v341 = vmul.f32 %v338, %v340
    %v342 = vadd.f32 %v338, %v341
    %vm343 = vweird.f32 %v336
    %vm344 = vweird.f32 %v338
    %vm345 = vmor %vm343, %vm344
    %v346 = vsel %vm345, %v338, %v342
    %v347 = vand.u32 2147483647, %v336
    %vm348 = vcmp.eq.f32.partialorder %v347, 8.507059e+37
    %v349 = vand.u32 %v336, 2147483648
    %v350 = vor.u32 1.1754944e-38, %v349
    %v351 = vsel %vm348, %v350, %v346
    %v352 = vmul.f32 1.0, %v351
    %v353 = vrcp.pop %v337
    %v354 = vmul.f32 %v337, %v353
    %v355 = vsub.f32 1.0, %v354
    %v356 = vmul.f32 %v353, %v355
    %v357 = vadd.f32 %v353, %v356
    %vm358 = vweird.f32 %v337
    %vm359 = vweird.f32 %v353
    %vm360 = vmor %vm358, %vm359
    %v361 = vsel %vm360, %v353, %v357
    %v362 = vand.u32 2147483647, %v337
    %vm363 = vcmp.eq.f32.partialorder %v362, 8.507059e+37
    %v364 = vand.u32 %v337, 2147483648
    %v365 = vor.u32 1.1754944e-38, %v364
    %v366 = vsel %vm363, %v365, %v361
    %v367 = vmul.f32 1.0, %v366
    %v368 = vtanh.pop %v328
    %v369 = vmul.f32 %v352, 0.0
    %371 = vrot.lane.b32.xlu0 %v368, 64
    %v372 = vpop.permute.xlu0 %371
    %v374 = vmul.f32 %v352, %v372
    %376 = vrot.lane.b32.xlu0 %v374, 64
    %v377 = vpop.permute.xlu0 %376
    %v379 = vadd.f32 %v369, %v377
    %v380 = vtanh.pop %v379
    %382 = vrot.lane.b32.xlu0 %v380, 64
    %v383 = vpop.permute.xlu0 %382
    %v385 = vmul.f32 %v367, %v383
    %v387 = vsel %vm155, %v256, 0
    %389 = vmatpush.msra.mxu0 0.0
    %390 = vmatpush.msra.mxu0 0.0
    %391 = vmatpush.msra.mxu0 0.0
    %392 = vmatpush.msra.mxu0 0.0
    %393 = vmatpush.msra.mxu0 0.0
    %394 = vmatpush.msra.mxu0 0.0
    %395 = vmatpush.msra.mxu0 0.0
    %396 = vmatpush.msra.mxu0 0.0
    %397 = vmatpush.msra.mxu0 %v153
    %398 = vmatpush.msra.mxu0 %v151
    %399 = vmatpush.msra.mxu0 %v149
    %400 = vmatpush.msra.mxu0 %v147
    %401 = vmatpush.msra.mxu0 %v145
    %402 = vmatpush.msra.mxu0 %v143
    %403 = vmatpush.msra.mxu0 %v141
    %404 = vmatpush.msra.mxu0 %v139
    %405 = vmatmul.f32.gmra.mxu0 %v387
    %v406 = vpop.f32.mrf.mxu0
    %v407 = vadd.f32 0.0, %v406
    %408 = vdwg.mxu0
    %409 = vmatpush.msra.mxu0 0.0
    %410 = vmatpush.msra.mxu0 0.0
    %411 = vmatpush.msra.mxu0 0.0
    %412 = vmatpush.msra.mxu0 0.0
    %413 = vmatpush.msra.mxu0 0.0
    %414 = vmatpush.msra.mxu0 0.0
    %415 = vmatpush.msra.mxu0 0.0
    %416 = vmatpush.msra.mxu0 0.0
    %417 = vmatpush.msra.mxu0 %v154
    %418 = vmatpush.msra.mxu0 %v152
    %419 = vmatpush.msra.mxu0 %v150
    %420 = vmatpush.msra.mxu0 %v148
    %421 = vmatpush.msra.mxu0 %v146
    %422 = vmatpush.msra.mxu0 %v144
    %423 = vmatpush.msra.mxu0 %v142
    %424 = vmatpush.msra.mxu0 %v140
    %425 = vmatmul.f32.gmra.mxu0 %v387
    %v426 = vpop.f32.mrf.mxu0
    %v427 = vadd.f32 0.0, %v426
    %428 = vdwg.mxu0
    %v431 = vrot.slane %v407, 6
    %v432 = vrot.slane %v427, 6
    %v435 = vadd.f32 %v105, %v431
    %v436 = vadd.f32 %v128, %v432
    %v437 = vxor.u32 %v435, 2147483648
    %v438 = vxor.u32 %v436, 2147483648
    %v439 = vmul.f32 %v437, 1.442695
    %v440 = vpow.pop %v439
    %v441 = vmul.f32 %v438, 1.442695
    %v442 = vpow.pop %v441
    %v443 = vadd.f32 %v440, 1.0
    %v444 = vadd.f32 %v442, 1.0
    %v445 = vrcp.pop %v443
    %v446 = vmul.f32 %v443, %v445
    %v447 = vsub.f32 1.0, %v446
    %v448 = vmul.f32 %v445, %v447
    %v449 = vadd.f32 %v445, %v448
    %vm450 = vweird.f32 %v443
    %vm451 = vweird.f32 %v445
    %vm452 = vmor %vm450, %vm451
    %v453 = vsel %vm452, %v445, %v449
    %v454 = vand.u32 2147483647, %v443
    %vm455 = vcmp.eq.f32.partialorder %v454, 8.507059e+37
    %v456 = vand.u32 %v443, 2147483648
    %v457 = vor.u32 1.1754944e-38, %v456
    %v458 = vsel %vm455, %v457, %v453
    %v459 = vmul.f32 1.0, %v458
    %v460 = vrcp.pop %v444
    %v461 = vmul.f32 %v444, %v460
    %v462 = vsub.f32 1.0, %v461
    %v463 = vmul.f32 %v460, %v462
    %v464 = vadd.f32 %v460, %v463
    %vm465 = vweird.f32 %v444
    %vm466 = vweird.f32 %v460
    %vm467 = vmor %vm465, %vm466
    %v468 = vsel %vm467, %v460, %v464
    %v469 = vand.u32 2147483647, %v444
    %vm470 = vcmp.eq.f32.partialorder %v469, 8.507059e+37
    %v471 = vand.u32 %v444, 2147483648
    %v472 = vor.u32 1.1754944e-38, %v471
    %v473 = vsel %vm470, %v472, %v468
    %v474 = vmul.f32 1.0, %v473
    %v475 = vtanh.pop %v436
    %v477 = vrot.slane %v250, 6
    %v479 = vmul.f32 %v459, %v477
    %481 = vrot.lane.b32.xlu0 %v475, 64
    %v482 = vpop.permute.xlu0 %481
    %v484 = vmul.f32 %v459, %v482
    %486 = vrot.lane.b32.xlu0 %v484, 64
    %v487 = vpop.permute.xlu0 %486
    %v489 = vadd.f32 %v479, %v487
    %v490 = vtanh.pop %v489
    %492 = vrot.lane.b32.xlu0 %v490, 64
    %v493 = vpop.permute.xlu0 %492
    %v495 = vmul.f32 %v474, %v493
    %v497 = vrot.slane %v385, 6
    %498 = vrot.lane.b32.xlu0 %v497, 64
    %v499 = vpop.permute.xlu0 %498
    %v501 = vsel %vm155, %v495, %v499
    %v503 = vrot.slane %v501, 2
    %505 = vmatpush.msra.mxu0 %v288
    %506 = vmatpush.msra.mxu0 %v286
    %507 = vmatpush.msra.mxu0 %v284
    %508 = vmatpush.msra.mxu0 %v282
    %509 = vmatpush.msra.mxu0 %v280
    %510 = vmatpush.msra.mxu0 %v278
    %511 = vmatpush.msra.mxu0 %v276
    %512 = vmatpush.msra.mxu0 %v274
    %513 = vmatpush.msra.mxu0 %v272
    %514 = vmatpush.msra.mxu0 %v270
    %515 = vmatpush.msra.mxu0 %v268
    %516 = vmatpush.msra.mxu0 %v266
    %517 = vmatpush.msra.mxu0 %v264
    %518 = vmatpush.msra.mxu0 %v262
    %519 = vmatpush.msra.mxu0 %v260
    %520 = vmatpush.msra.mxu0 %v258
    %521 = vmatmul.f32.gmra.mxu0 %v503
    %v522 = vpop.f32.mrf.mxu0
    %v523 = vadd.f32 %v135, %v522
    %524 = vdwg.mxu0
    %525 = vmatpush.msra.mxu0 %v289
    %526 = vmatpush.msra.mxu0 %v287
    %527 = vmatpush.msra.mxu0 %v285
    %528 = vmatpush.msra.mxu0 %v283
    %529 = vmatpush.msra.mxu0 %v281
    %530 = vmatpush.msra.mxu0 %v279
    %531 = vmatpush.msra.mxu0 %v277
    %532 = vmatpush.msra.mxu0 %v275
    %533 = vmatpush.msra.mxu0 %v273
    %534 = vmatpush.msra.mxu0 %v271
    %535 = vmatpush.msra.mxu0 %v269
    %536 = vmatpush.msra.mxu0 %v267
    %537 = vmatpush.msra.mxu0 %v265
    %538 = vmatpush.msra.mxu0 %v263
    %539 = vmatpush.msra.mxu0 %v261
    %540 = vmatpush.msra.mxu0 %v259
    %541 = vmatmul.f32.gmra.mxu0 %v503
    %v542 = vpop.f32.mrf.mxu0
    %v543 = vadd.f32 %v136, %v542
    %544 = vdwg.mxu0
    %v545 = vxor.u32 %v523, 2147483648
    %v546 = vxor.u32 %v543, 2147483648
    %v547 = vmul.f32 %v545, 1.442695
    %v548 = vpow.pop %v547
    %v549 = vmul.f32 %v546, 1.442695
    %v550 = vpow.pop %v549
    %v551 = vadd.f32 %v548, 1.0
    %v552 = vadd.f32 %v550, 1.0
    %v553 = vrcp.pop %v551
    %v554 = vmul.f32 %v551, %v553
    %v555 = vsub.f32 1.0, %v554
    %v556 = vmul.f32 %v553, %v555
    %v557 = vadd.f32 %v553, %v556
    %vm558 = vweird.f32 %v551
    %vm559 = vweird.f32 %v553
    %vm560 = vmor %vm558, %vm559
    %v561 = vsel %vm560, %v553, %v557
    %v562 = vand.u32 2147483647, %v551
    %vm563 = vcmp.eq.f32.partialorder %v562, 8.507059e+37
    %v564 = vand.u32 %v551, 2147483648
    %v565 = vor.u32 1.1754944e-38, %v564
    %v566 = vsel %vm563, %v565, %v561
    %v567 = vmul.f32 1.0, %v566
    %v568 = vrcp.pop %v552
    %v569 = vmul.f32 %v552, %v568
    %v570 = vsub.f32 1.0, %v569
    %v571 = vmul.f32 %v568, %v570
    %v572 = vadd.f32 %v568, %v571
    %vm573 = vweird.f32 %v552
    %vm574 = vweird.f32 %v568
    %vm575 = vmor %vm573, %vm574
    %v576 = vsel %vm575, %v568, %v572
    %v577 = vand.u32 2147483647, %v552
    %vm578 = vcmp.eq.f32.partialorder %v577, 8.507059e+37
    %v579 = vand.u32 %v552, 2147483648
    %v580 = vor.u32 1.1754944e-38, %v579
    %v581 = vsel %vm578, %v580, %v576
    %v582 = vmul.f32 1.0, %v581
    %v583 = vtanh.pop %v543
    %v584 = vmul.f32 %v567, %v379
    %586 = vrot.lane.b32.xlu0 %v583, 64
    %v587 = vpop.permute.xlu0 %586
    %v589 = vmul.f32 %v567, %v587
    %591 = vrot.lane.b32.xlu0 %v589, 64
    %v592 = vpop.permute.xlu0 %591
    %v594 = vadd.f32 %v584, %v592
    %v595 = vtanh.pop %v594
    %597 = vrot.lane.b32.xlu0 %v595, 64
    %v598 = vpop.permute.xlu0 %597
    %v600 = vmul.f32 %v582, %v598
    %v602 = vrot.slane %v495, 2
    %v603 = vsel %vm155, %v602, 0
    %605 = vmatpush.msra.mxu0 0.0
    %606 = vmatpush.msra.mxu0 0.0
    %607 = vmatpush.msra.mxu0 0.0
    %608 = vmatpush.msra.mxu0 0.0
    %609 = vmatpush.msra.mxu0 0.0
    %610 = vmatpush.msra.mxu0 0.0
    %611 = vmatpush.msra.mxu0 0.0
    %612 = vmatpush.msra.mxu0 0.0
    %613 = vmatpush.msra.mxu0 %v153
    %614 = vmatpush.msra.mxu0 %v151
    %615 = vmatpush.msra.mxu0 %v149
    %616 = vmatpush.msra.mxu0 %v147
    %617 = vmatpush.msra.mxu0 %v145
    %618 = vmatpush.msra.mxu0 %v143
    %619 = vmatpush.msra.mxu0 %v141
    %620 = vmatpush.msra.mxu0 %v139
    %621 = vmatmul.f32.gmra.mxu0 %v603
    %v622 = vpop.f32.mrf.mxu0
    %v623 = vadd.f32 0.0, %v622
    %624 = vdwg.mxu0
    %625 = vmatpush.msra.mxu0 0.0
    %626 = vmatpush.msra.mxu0 0.0
    %627 = vmatpush.msra.mxu0 0.0
    %628 = vmatpush.msra.mxu0 0.0
    %629 = vmatpush.msra.mxu0 0.0
    %630 = vmatpush.msra.mxu0 0.0
    %631 = vmatpush.msra.mxu0 0.0
    %632 = vmatpush.msra.mxu0 0.0
    %633 = vmatpush.msra.mxu0 %v154
    %634 = vmatpush.msra.mxu0 %v152
    %635 = vmatpush.msra.mxu0 %v150
    %636 = vmatpush.msra.mxu0 %v148
    %637 = vmatpush.msra.mxu0 %v146
    %638 = vmatpush.msra.mxu0 %v144
    %639 = vmatpush.msra.mxu0 %v142
    %640 = vmatpush.msra.mxu0 %v140
    %641 = vmatmul.f32.gmra.mxu0 %v603
    %v642 = vpop.f32.mrf.mxu0
    %v643 = vadd.f32 0.0, %v642
    %644 = vdwg.mxu0
    %v647 = vrot.slane %v623, 4
    %v648 = vrot.slane %v643, 4
    %v651 = vadd.f32 %v105, %v647
    %v652 = vadd.f32 %v128, %v648
    %v653 = vxor.u32 %v651, 2147483648
    %v654 = vxor.u32 %v652, 2147483648
    %v655 = vmul.f32 %v653, 1.442695
    %v656 = vpow.pop %v655
    %v657 = vmul.f32 %v654, 1.442695
    %v658 = vpow.pop %v657
    %v659 = vadd.f32 %v656, 1.0
    %v660 = vadd.f32 %v658, 1.0
    %v661 = vrcp.pop %v659
    %v662 = vmul.f32 %v659, %v661
    %v663 = vsub.f32 1.0, %v662
    %v664 = vmul.f32 %v661, %v663
    %v665 = vadd.f32 %v661, %v664
    %vm666 = vweird.f32 %v659
    %vm667 = vweird.f32 %v661
    %vm668 = vmor %vm666, %vm667
    %v669 = vsel %vm668, %v661, %v665
    %v670 = vand.u32 2147483647, %v659
    %vm671 = vcmp.eq.f32.partialorder %v670, 8.507059e+37
    %v672 = vand.u32 %v659, 2147483648
    %v673 = vor.u32 1.1754944e-38, %v672
    %v674 = vsel %vm671, %v673, %v669
    %v675 = vmul.f32 1.0, %v674
    %v676 = vrcp.pop %v660
    %v677 = vmul.f32 %v660, %v676
    %v678 = vsub.f32 1.0, %v677
    %v679 = vmul.f32 %v676, %v678
    %v680 = vadd.f32 %v676, %v679
    %vm681 = vweird.f32 %v660
    %vm682 = vweird.f32 %v676
    %vm683 = vmor %vm681, %vm682
    %v684 = vsel %vm683, %v676, %v680
    %v685 = vand.u32 2147483647, %v660
    %vm686 = vcmp.eq.f32.partialorder %v685, 8.507059e+37
    %v687 = vand.u32 %v660, 2147483648
    %v688 = vor.u32 1.1754944e-38, %v687
    %v689 = vsel %vm686, %v688, %v684
    %v690 = vmul.f32 1.0, %v689
    %v691 = vtanh.pop %v652
    %v693 = vrot.slane %v489, 6
    %v695 = vmul.f32 %v675, %v693
    %697 = vrot.lane.b32.xlu0 %v691, 64
    %v698 = vpop.permute.xlu0 %697
    %v700 = vmul.f32 %v675, %v698
    %702 = vrot.lane.b32.xlu0 %v700, 64
    %v703 = vpop.permute.xlu0 %702
    %v705 = vadd.f32 %v695, %v703
    %v706 = vtanh.pop %v705
    %708 = vrot.lane.b32.xlu0 %v706, 64
    %v709 = vpop.permute.xlu0 %708
    %v711 = vmul.f32 %v690, %v709
    %v713 = vrot.slane %v600, 4
    %714 = vrot.lane.b32.xlu0 %v713, 64
    %v715 = vpop.permute.xlu0 %714
    %v717 = vsel %vm155, %v711, %v715
    %v719 = vrot.slane %v717, 4
    %721 = vmatpush.msra.mxu0 %v288
    %722 = vmatpush.msra.mxu0 %v286
    %723 = vmatpush.msra.mxu0 %v284
    %724 = vmatpush.msra.mxu0 %v282
    %725 = vmatpush.msra.mxu0 %v280
    %726 = vmatpush.msra.mxu0 %v278
    %727 = vmatpush.msra.mxu0 %v276
    %728 = vmatpush.msra.mxu0 %v274
    %729 = vmatpush.msra.mxu0 %v272
    %730 = vmatpush.msra.mxu0 %v270
    %731 = vmatpush.msra.mxu0 %v268
    %732 = vmatpush.msra.mxu0 %v266
    %733 = vmatpush.msra.mxu0 %v264
    %734 = vmatpush.msra.mxu0 %v262
    %735 = vmatpush.msra.mxu0 %v260
    %736 = vmatpush.msra.mxu0 %v258
    %737 = vmatmul.f32.gmra.mxu0 %v719
    %v738 = vpop.f32.mrf.mxu0
    %v739 = vadd.f32 %v135, %v738
    %740 = vdwg.mxu0
    %741 = vmatpush.msra.mxu0 %v289
    %742 = vmatpush.msra.mxu0 %v287
    %743 = vmatpush.msra.mxu0 %v285
    %744 = vmatpush.msra.mxu0 %v283
    %745 = vmatpush.msra.mxu0 %v281
    %746 = vmatpush.msra.mxu0 %v279
    %747 = vmatpush.msra.mxu0 %v277
    %748 = vmatpush.msra.mxu0 %v275
    %749 = vmatpush.msra.mxu0 %v273
    %750 = vmatpush.msra.mxu0 %v271
    %751 = vmatpush.msra.mxu0 %v269
    %752 = vmatpush.msra.mxu0 %v267
    %753 = vmatpush.msra.mxu0 %v265
    %754 = vmatpush.msra.mxu0 %v263
    %755 = vmatpush.msra.mxu0 %v261
    %756 = vmatpush.msra.mxu0 %v259
    %757 = vmatmul.f32.gmra.mxu0 %v719
    %v758 = vpop.f32.mrf.mxu0
    %v759 = vadd.f32 %v136, %v758
    %760 = vdwg.mxu0
    %v761 = vxor.u32 %v739, 2147483648
    %v762 = vxor.u32 %v759, 2147483648
    %v763 = vmul.f32 %v761, 1.442695
    %v764 = vpow.pop %v763
    %v765 = vmul.f32 %v762, 1.442695
    %v766 = vpow.pop %v765
    %v767 = vadd.f32 %v764, 1.0
    %v768 = vadd.f32 %v766, 1.0
    %v769 = vrcp.pop %v767
    %v770 = vmul.f32 %v767, %v769
    %v771 = vsub.f32 1.0, %v770
    %v772 = vmul.f32 %v769, %v771
    %v773 = vadd.f32 %v769, %v772
    %vm774 = vweird.f32 %v767
    %vm775 = vweird.f32 %v769
    %vm776 = vmor %vm774, %vm775
    %v777 = vsel %vm776, %v769, %v773
    %v778 = vand.u32 2147483647, %v767
    %vm779 = vcmp.eq.f32.partialorder %v778, 8.507059e+37
    %v780 = vand.u32 %v767, 2147483648
    %v781 = vor.u32 1.1754944e-38, %v780
    %v782 = vsel %vm779, %v781, %v777
    %v783 = vmul.f32 1.0, %v782
    %v784 = vrcp.pop %v768
    %v785 = vmul.f32 %v768, %v784
    %v786 = vsub.f32 1.0, %v785
    %v787 = vmul.f32 %v784, %v786
    %v788 = vadd.f32 %v784, %v787
    %vm789 = vweird.f32 %v768
    %vm790 = vweird.f32 %v784
    %vm791 = vmor %vm789, %vm790
    %v792 = vsel %vm791, %v784, %v788
    %v793 = vand.u32 2147483647, %v768
    %vm794 = vcmp.eq.f32.partialorder %v793, 8.507059e+37
    %v795 = vand.u32 %v768, 2147483648
    %v796 = vor.u32 1.1754944e-38, %v795
    %v797 = vsel %vm794, %v796, %v792
    %v798 = vmul.f32 1.0, %v797
    %v799 = vtanh.pop %v759
    %v800 = vmul.f32 %v783, %v594
    %802 = vrot.lane.b32.xlu0 %v799, 64
    %v803 = vpop.permute.xlu0 %802
    %v805 = vmul.f32 %v783, %v803
    %807 = vrot.lane.b32.xlu0 %v805, 64
    %v808 = vpop.permute.xlu0 %807
    %v810 = vadd.f32 %v800, %v808
    %v811 = vtanh.pop %v810
    %813 = vrot.lane.b32.xlu0 %v811, 64
    %v814 = vpop.permute.xlu0 %813
    %v816 = vmul.f32 %v798, %v814
    %v818 = vrot.slane %v711, 4
    %v819 = vsel %vm155, %v818, 0
    %821 = vmatpush.msra.mxu0 0.0
    %822 = vmatpush.msra.mxu0 0.0
    %823 = vmatpush.msra.mxu0 0.0
    %824 = vmatpush.msra.mxu0 0.0
    %825 = vmatpush.msra.mxu0 0.0
    %826 = vmatpush.msra.mxu0 0.0
    %827 = vmatpush.msra.mxu0 0.0
    %828 = vmatpush.msra.mxu0 0.0
    %829 = vmatpush.msra.mxu0 %v153
    %830 = vmatpush.msra.mxu0 %v151
    %831 = vmatpush.msra.mxu0 %v149
    %832 = vmatpush.msra.mxu0 %v147
    %833 = vmatpush.msra.mxu0 %v145
    %834 = vmatpush.msra.mxu0 %v143
    %835 = vmatpush.msra.mxu0 %v141
    %836 = vmatpush.msra.mxu0 %v139
    %837 = vmatmul.f32.gmra.mxu0 %v819
    %v838 = vpop.f32.mrf.mxu0
    %v839 = vadd.f32 0.0, %v838
    %840 = vdwg.mxu0
    %841 = vmatpush.msra.mxu0 0.0
    %842 = vmatpush.msra.mxu0 0.0
    %843 = vmatpush.msra.mxu0 0.0
    %844 = vmatpush.msra.mxu0 0.0
    %845 = vmatpush.msra.mxu0 0.0
    %846 = vmatpush.msra.mxu0 0.0
    %847 = vmatpush.msra.mxu0 0.0
    %848 = vmatpush.msra.mxu0 0.0
    %849 = vmatpush.msra.mxu0 %v154
    %850 = vmatpush.msra.mxu0 %v152
    %851 = vmatpush.msra.mxu0 %v150
    %852 = vmatpush.msra.mxu0 %v148
    %853 = vmatpush.msra.mxu0 %v146
    %854 = vmatpush.msra.mxu0 %v144
    %855 = vmatpush.msra.mxu0 %v142
    %856 = vmatpush.msra.mxu0 %v140
    %857 = vmatmul.f32.gmra.mxu0 %v819
    %v858 = vpop.f32.mrf.mxu0
    %v859 = vadd.f32 0.0, %v858
    %860 = vdwg.mxu0
    %v863 = vrot.slane %v839, 2
    %v864 = vrot.slane %v859, 2
    %v867 = vadd.f32 %v105, %v863
    %v868 = vadd.f32 %v128, %v864
    %v869 = vxor.u32 %v867, 2147483648
    %v870 = vxor.u32 %v868, 2147483648
    %v871 = vmul.f32 %v869, 1.442695
    %v872 = vpow.pop %v871
    %v873 = vmul.f32 %v870, 1.442695
    %v874 = vpow.pop %v873
    %v875 = vadd.f32 %v872, 1.0
    %v876 = vadd.f32 %v874, 1.0
    %v877 = vrcp.pop %v875
    %v878 = vmul.f32 %v875, %v877
    %v879 = vsub.f32 1.0, %v878
    %v880 = vmul.f32 %v877, %v879
    %v881 = vadd.f32 %v877, %v880
    %vm882 = vweird.f32 %v875
    %vm883 = vweird.f32 %v877
    %vm884 = vmor %vm882, %vm883
    %v885 = vsel %vm884, %v877, %v881
    %v886 = vand.u32 2147483647, %v875
    %vm887 = vcmp.eq.f32.partialorder %v886, 8.507059e+37
    %v888 = vand.u32 %v875, 2147483648
    %v889 = vor.u32 1.1754944e-38, %v888
    %v890 = vsel %vm887, %v889, %v885
    %v891 = vmul.f32 1.0, %v890
    %v892 = vrcp.pop %v876
    %v893 = vmul.f32 %v876, %v892
    %v894 = vsub.f32 1.0, %v893
    %v895 = vmul.f32 %v892, %v894
    %v896 = vadd.f32 %v892, %v895
    %vm897 = vweird.f32 %v876
    %vm898 = vweird.f32 %v892
    %vm899 = vmor %vm897, %vm898
    %v900 = vsel %vm899, %v892, %v896
    %v901 = vand.u32 2147483647, %v876
    %vm902 = vcmp.eq.f32.partialorder %v901, 8.507059e+37
    %v903 = vand.u32 %v876, 2147483648
    %v904 = vor.u32 1.1754944e-38, %v903
    %v905 = vsel %vm902, %v904, %v900
    %v906 = vmul.f32 1.0, %v905
    %v907 = vtanh.pop %v868
    %v909 = vrot.slane %v705, 6
    %v911 = vmul.f32 %v891, %v909
    %913 = vrot.lane.b32.xlu0 %v907, 64
    %v914 = vpop.permute.xlu0 %913
    %v916 = vmul.f32 %v891, %v914
    %918 = vrot.lane.b32.xlu0 %v916, 64
    %v919 = vpop.permute.xlu0 %918
    %v921 = vadd.f32 %v911, %v919
    %v922 = vtanh.pop %v921
    %924 = vrot.lane.b32.xlu0 %v922, 64
    %v925 = vpop.permute.xlu0 %924
    %v927 = vmul.f32 %v906, %v925
    %v929 = vrot.slane %v816, 2
    %930 = vrot.lane.b32.xlu0 %v929, 64
    %v931 = vpop.permute.xlu0 %930
    %v933 = vsel %vm155, %v927, %v931
    %v935 = vrot.slane %v933, 6
    %937 = vmatpush.msra.mxu0 %v288
    %938 = vmatpush.msra.mxu0 %v286
    %939 = vmatpush.msra.mxu0 %v284
    %940 = vmatpush.msra.mxu0 %v282
    %941 = vmatpush.msra.mxu0 %v280
    %942 = vmatpush.msra.mxu0 %v278
    %943 = vmatpush.msra.mxu0 %v276
    %944 = vmatpush.msra.mxu0 %v274
    %945 = vmatpush.msra.mxu0 %v272
    %946 = vmatpush.msra.mxu0 %v270
    %947 = vmatpush.msra.mxu0 %v268
    %948 = vmatpush.msra.mxu0 %v266
    %949 = vmatpush.msra.mxu0 %v264
    %950 = vmatpush.msra.mxu0 %v262
    %951 = vmatpush.msra.mxu0 %v260
    %952 = vmatpush.msra.mxu0 %v258
    %953 = vmatmul.f32.gmra.mxu0 %v935
    %v954 = vpop.f32.mrf.mxu0
    %v955 = vadd.f32 %v135, %v954
    %956 = vdwg.mxu0
    %957 = vmatpush.msra.mxu0 %v289
    %958 = vmatpush.msra.mxu0 %v287
    %959 = vmatpush.msra.mxu0 %v285
    %960 = vmatpush.msra.mxu0 %v283
    %961 = vmatpush.msra.mxu0 %v281
    %962 = vmatpush.msra.mxu0 %v279
    %963 = vmatpush.msra.mxu0 %v277
    %964 = vmatpush.msra.mxu0 %v275
    %965 = vmatpush.msra.mxu0 %v273
    %966 = vmatpush.msra.mxu0 %v271
    %967 = vmatpush.msra.mxu0 %v269
    %968 = vmatpush.msra.mxu0 %v267
    %969 = vmatpush.msra.mxu0 %v265
    %970 = vmatpush.msra.mxu0 %v263
    %971 = vmatpush.msra.mxu0 %v261
    %972 = vmatpush.msra.mxu0 %v259
    %973 = vmatmul.f32.gmra.mxu0 %v935
    %v974 = vpop.f32.mrf.mxu0
    %v975 = vadd.f32 %v136, %v974
    %976 = vdwg.mxu0
    %v977 = vxor.u32 %v955, 2147483648
    %v978 = vxor.u32 %v975, 2147483648
    %v979 = vmul.f32 %v977, 1.442695
    %v980 = vpow.pop %v979
    %v981 = vmul.f32 %v978, 1.442695
    %v982 = vpow.pop %v981
    %v983 = vadd.f32 %v980, 1.0
    %v984 = vadd.f32 %v982, 1.0
    %v985 = vrcp.pop %v983
    %v986 = vmul.f32 %v983, %v985
    %v987 = vsub.f32 1.0, %v986
    %v988 = vmul.f32 %v985, %v987
    %v989 = vadd.f32 %v985, %v988
    %vm990 = vweird.f32 %v983
    %vm991 = vweird.f32 %v985
    %vm992 = vmor %vm990, %vm991
    %v993 = vsel %vm992, %v985, %v989
    %v994 = vand.u32 2147483647, %v983
    %vm995 = vcmp.eq.f32.partialorder %v994, 8.507059e+37
    %v996 = vand.u32 %v983, 2147483648
    %v997 = vor.u32 1.1754944e-38, %v996
    %v998 = vsel %vm995, %v997, %v993
    %v999 = vmul.f32 1.0, %v998
    %v1000 = vrcp.pop %v984
    %v1001 = vmul.f32 %v984, %v1000
    %v1002 = vsub.f32 1.0, %v1001
    %v1003 = vmul.f32 %v1000, %v1002
    %v1004 = vadd.f32 %v1000, %v1003
    %vm1005 = vweird.f32 %v984
    %vm1006 = vweird.f32 %v1000
    %vm1007 = vmor %vm1005, %vm1006
    %v1008 = vsel %vm1007, %v1000, %v1004
    %v1009 = vand.u32 2147483647, %v984
    %vm1010 = vcmp.eq.f32.partialorder %v1009, 8.507059e+37
    %v1011 = vand.u32 %v984, 2147483648
    %v1012 = vor.u32 1.1754944e-38, %v1011
    %v1013 = vsel %vm1010, %v1012, %v1008
    %v1014 = vmul.f32 1.0, %v1013
    %v1015 = vtanh.pop %v975
    %v1016 = vmul.f32 %v999, %v810
    %1018 = vrot.lane.b32.xlu0 %v1015, 64
    %v1019 = vpop.permute.xlu0 %1018
    %v1021 = vmul.f32 %v999, %v1019
    %1023 = vrot.lane.b32.xlu0 %v1021, 64
    %v1024 = vpop.permute.xlu0 %1023
    %v1026 = vadd.f32 %v1016, %v1024
    %v1027 = vtanh.pop %v1026
    %1029 = vrot.lane.b32.xlu0 %v1027, 64
    %v1030 = vpop.permute.xlu0 %1029
    %v1032 = vmul.f32 %v1014, %v1030
    %v1034 = vrot.slane %v927, 6
    %v1035 = vsel %vm155, %v1034, 0
    %1037 = vmatpush.msra.mxu0 0.0
    %1038 = vmatpush.msra.mxu0 0.0
    %1039 = vmatpush.msra.mxu0 0.0
    %1040 = vmatpush.msra.mxu0 0.0
    %1041 = vmatpush.msra.mxu0 0.0
    %1042 = vmatpush.msra.mxu0 0.0
    %1043 = vmatpush.msra.mxu0 0.0
    %1044 = vmatpush.msra.mxu0 0.0
    %1045 = vmatpush.msra.mxu0 %v153
    %1046 = vmatpush.msra.mxu0 %v151
    %1047 = vmatpush.msra.mxu0 %v149
    %1048 = vmatpush.msra.mxu0 %v147
    %1049 = vmatpush.msra.mxu0 %v145
    %1050 = vmatpush.msra.mxu0 %v143
    %1051 = vmatpush.msra.mxu0 %v141
    %1052 = vmatpush.msra.mxu0 %v139
    %1053 = vmatmul.f32.gmra.mxu0 %v1035
    %v1054 = vpop.f32.mrf.mxu0
    %v1055 = vadd.f32 0.0, %v1054
    %1056 = vdwg.mxu0
    %1057 = vmatpush.msra.mxu0 0.0
    %1058 = vmatpush.msra.mxu0 0.0
    %1059 = vmatpush.msra.mxu0 0.0
    %1060 = vmatpush.msra.mxu0 0.0
    %1061 = vmatpush.msra.mxu0 0.0
    %1062 = vmatpush.msra.mxu0 0.0
    %1063 = vmatpush.msra.mxu0 0.0
    %1064 = vmatpush.msra.mxu0 0.0
    %1065 = vmatpush.msra.mxu0 %v154
    %1066 = vmatpush.msra.mxu0 %v152
    %1067 = vmatpush.msra.mxu0 %v150
    %1068 = vmatpush.msra.mxu0 %v148
    %1069 = vmatpush.msra.mxu0 %v146
    %1070 = vmatpush.msra.mxu0 %v144
    %1071 = vmatpush.msra.mxu0 %v142
    %1072 = vmatpush.msra.mxu0 %v140
    %1073 = vmatmul.f32.gmra.mxu0 %v1035
    %v1074 = vpop.f32.mrf.mxu0
    %v1075 = vadd.f32 0.0, %v1074
    %1076 = vdwg.mxu0
    %v1077 = vadd.f32 %v108, %v1055
    %v1078 = vadd.f32 %v131, %v1075
    %v1079 = vxor.u32 %v1077, 2147483648
    %v1080 = vxor.u32 %v1078, 2147483648
    %v1081 = vmul.f32 %v1079, 1.442695
    %v1082 = vpow.pop %v1081
    %v1083 = vmul.f32 %v1080, 1.442695
    %v1084 = vpow.pop %v1083
    %v1085 = vadd.f32 %v1082, 1.0
    %v1086 = vadd.f32 %v1084, 1.0
    %v1087 = vrcp.pop %v1085
    %v1088 = vmul.f32 %v1085, %v1087
    %v1089 = vsub.f32 1.0, %v1088
    %v1090 = vmul.f32 %v1087, %v1089
    %v1091 = vadd.f32 %v1087, %v1090
    %vm1092 = vweird.f32 %v1085
    %vm1093 = vweird.f32 %v1087
    %vm1094 = vmor %vm1092, %vm1093
    %v1095 = vsel %vm1094, %v1087, %v1091
    %v1096 = vand.u32 2147483647, %v1085
    %vm1097 = vcmp.eq.f32.partialorder %v1096, 8.507059e+37
    %v1098 = vand.u32 %v1085, 2147483648
    %v1099 = vor.u32 1.1754944e-38, %v1098
    %v1100 = vsel %vm1097, %v1099, %v1095
    %v1101 = vmul.f32 1.0, %v1100
    %v1102 = vrcp.pop %v1086
    %v1103 = vmul.f32 %v1086, %v1102
    %v1104 = vsub.f32 1.0, %v1103
    %v1105 = vmul.f32 %v1102, %v1104
    %v1106 = vadd.f32 %v1102, %v1105
    %vm1107 = vweird.f32 %v1086
    %vm1108 = vweird.f32 %v1102
    %vm1109 = vmor %vm1107, %vm1108
    %v1110 = vsel %vm1109, %v1102, %v1106
    %v1111 = vand.u32 2147483647, %v1086
    %vm1112 = vcmp.eq.f32.partialorder %v1111, 8.507059e+37
    %v1113 = vand.u32 %v1086, 2147483648
    %v1114 = vor.u32 1.1754944e-38, %v1113
    %v1115 = vsel %vm1112, %v1114, %v1110
    %v1116 = vmul.f32 1.0, %v1115
    %v1117 = vtanh.pop %v1078
    %v1119 = vrot.slane %v921, 6
    %v1121 = vmul.f32 %v1101, %v1119
    %1123 = vrot.lane.b32.xlu0 %v1117, 64
    %v1124 = vpop.permute.xlu0 %1123
    %v1126 = vmul.f32 %v1101, %v1124
    %1128 = vrot.lane.b32.xlu0 %v1126, 64
    %v1129 = vpop.permute.xlu0 %1128
    %v1131 = vadd.f32 %v1121, %v1129
    %v1132 = vtanh.pop %v1131
    %1134 = vrot.lane.b32.xlu0 %v1132, 64
    %v1135 = vpop.permute.xlu0 %1134
    %v1137 = vmul.f32 %v1116, %v1135
    %1139 = vrot.lane.b32.xlu0 %v1032, 64
    %v1140 = vpop.permute.xlu0 %1139
    %v1142 = vsel %vm155, %v1137, %v1140
    %1143 = vmatpush.msra.mxu0 %v288
    %1144 = vmatpush.msra.mxu0 %v286
    %1145 = vmatpush.msra.mxu0 %v284
    %1146 = vmatpush.msra.mxu0 %v282
    %1147 = vmatpush.msra.mxu0 %v280
    %1148 = vmatpush.msra.mxu0 %v278
    %1149 = vmatpush.msra.mxu0 %v276
    %1150 = vmatpush.msra.mxu0 %v274
    %1151 = vmatpush.msra.mxu0 %v272
    %1152 = vmatpush.msra.mxu0 %v270
    %1153 = vmatpush.msra.mxu0 %v268
    %1154 = vmatpush.msra.mxu0 %v266
    %1155 = vmatpush.msra.mxu0 %v264
    %1156 = vmatpush.msra.mxu0 %v262
    %1157 = vmatpush.msra.mxu0 %v260
    %1158 = vmatpush.msra.mxu0 %v258
    %1159 = vmatmul.f32.gmra.mxu0 %v1142
    %v1160 = vpop.f32.mrf.mxu0
    %v1161 = vadd.f32 %v135, %v1160
    %1162 = vdwg.mxu0
    %1163 = vmatpush.msra.mxu0 %v289
    %1164 = vmatpush.msra.mxu0 %v287
    %1165 = vmatpush.msra.mxu0 %v285
    %1166 = vmatpush.msra.mxu0 %v283
    %1167 = vmatpush.msra.mxu0 %v281
    %1168 = vmatpush.msra.mxu0 %v279
    %1169 = vmatpush.msra.mxu0 %v277
    %1170 = vmatpush.msra.mxu0 %v275
    %1171 = vmatpush.msra.mxu0 %v273
    %1172 = vmatpush.msra.mxu0 %v271
    %1173 = vmatpush.msra.mxu0 %v269
    %1174 = vmatpush.msra.mxu0 %v267
    %1175 = vmatpush.msra.mxu0 %v265
    %1176 = vmatpush.msra.mxu0 %v263
    %1177 = vmatpush.msra.mxu0 %v261
    %1178 = vmatpush.msra.mxu0 %v259
    %1179 = vmatmul.f32.gmra.mxu0 %v1142
    %v1180 = vpop.f32.mrf.mxu0
    %v1181 = vadd.f32 %v136, %v1180
    %1182 = vdwg.mxu0
    %v1183 = vxor.u32 %v1161, 2147483648
    %v1184 = vxor.u32 %v1181, 2147483648
    %v1185 = vmul.f32 %v1183, 1.442695
    %v1186 = vpow.pop %v1185
    %v1187 = vmul.f32 %v1184, 1.442695
    %v1188 = vpow.pop %v1187
    %v1189 = vadd.f32 %v1186, 1.0
    %v1190 = vadd.f32 %v1188, 1.0
    %v1191 = vrcp.pop %v1189
    %v1192 = vmul.f32 %v1189, %v1191
    %v1193 = vsub.f32 1.0, %v1192
    %v1194 = vmul.f32 %v1191, %v1193
    %v1195 = vadd.f32 %v1191, %v1194
    %vm1196 = vweird.f32 %v1189
    %vm1197 = vweird.f32 %v1191
    %vm1198 = vmor %vm1196, %vm1197
    %v1199 = vsel %vm1198, %v1191, %v1195
    %v1200 = vand.u32 2147483647, %v1189
    %vm1201 = vcmp.eq.f32.partialorder %v1200, 8.507059e+37
    %v1202 = vand.u32 %v1189, 2147483648
    %v1203 = vor.u32 1.1754944e-38, %v1202
    %v1204 = vsel %vm1201, %v1203, %v1199
    %v1205 = vmul.f32 1.0, %v1204
    %v1206 = vrcp.pop %v1190
    %v1207 = vmul.f32 %v1190, %v1206
    %v1208 = vsub.f32 1.0, %v1207
    %v1209 = vmul.f32 %v1206, %v1208
    %v1210 = vadd.f32 %v1206, %v1209
    %vm1211 = vweird.f32 %v1190
    %vm1212 = vweird.f32 %v1206
    %vm1213 = vmor %vm1211, %vm1212
    %v1214 = vsel %vm1213, %v1206, %v1210
    %v1215 = vand.u32 2147483647, %v1190
    %vm1216 = vcmp.eq.f32.partialorder %v1215, 8.507059e+37
    %v1217 = vand.u32 %v1190, 2147483648
    %v1218 = vor.u32 1.1754944e-38, %v1217
    %v1219 = vsel %vm1216, %v1218, %v1214
    %v1220 = vmul.f32 1.0, %v1219
    %v1221 = vtanh.pop %v1181
    %v1222 = vmul.f32 %v1205, %v1026
    %1224 = vrot.lane.b32.xlu0 %v1221, 64
    %v1225 = vpop.permute.xlu0 %1224
    %v1227 = vmul.f32 %v1205, %v1225
    %1229 = vrot.lane.b32.xlu0 %v1227, 64
    %v1230 = vpop.permute.xlu0 %1229
    %v1232 = vadd.f32 %v1222, %v1230
    %v1233 = vtanh.pop %v1232
    %1235 = vrot.lane.b32.xlu0 %v1233, 64
    %v1236 = vpop.permute.xlu0 %1235
    %v1238 = vmul.f32 %v1220, %v1236
    %v1240 = vsel %vm155, %v1137, 0
    %1242 = vmatpush.msra.mxu0 0.0
    %1243 = vmatpush.msra.mxu0 0.0
    %1244 = vmatpush.msra.mxu0 0.0
    %1245 = vmatpush.msra.mxu0 0.0
    %1246 = vmatpush.msra.mxu0 0.0
    %1247 = vmatpush.msra.mxu0 0.0
    %1248 = vmatpush.msra.mxu0 0.0
    %1249 = vmatpush.msra.mxu0 0.0
    %1250 = vmatpush.msra.mxu0 %v153
    %1251 = vmatpush.msra.mxu0 %v151
    %1252 = vmatpush.msra.mxu0 %v149
    %1253 = vmatpush.msra.mxu0 %v147
    %1254 = vmatpush.msra.mxu0 %v145
    %1255 = vmatpush.msra.mxu0 %v143
    %1256 = vmatpush.msra.mxu0 %v141
    %1257 = vmatpush.msra.mxu0 %v139
    %1258 = vmatmul.f32.gmra.mxu0 %v1240
    %v1259 = vpop.f32.mrf.mxu0
    %v1260 = vadd.f32 0.0, %v1259
    %1261 = vdwg.mxu0
    %1262 = vmatpush.msra.mxu0 0.0
    %1263 = vmatpush.msra.mxu0 0.0
    %1264 = vmatpush.msra.mxu0 0.0
    %1265 = vmatpush.msra.mxu0 0.0
    %1266 = vmatpush.msra.mxu0 0.0
    %1267 = vmatpush.msra.mxu0 0.0
    %1268 = vmatpush.msra.mxu0 0.0
    %1269 = vmatpush.msra.mxu0 0.0
    %1270 = vmatpush.msra.mxu0 %v154
    %1271 = vmatpush.msra.mxu0 %v152
    %1272 = vmatpush.msra.mxu0 %v150
    %1273 = vmatpush.msra.mxu0 %v148
    %1274 = vmatpush.msra.mxu0 %v146
    %1275 = vmatpush.msra.mxu0 %v144
    %1276 = vmatpush.msra.mxu0 %v142
    %1277 = vmatpush.msra.mxu0 %v140
    %1278 = vmatmul.f32.gmra.mxu0 %v1240
    %v1279 = vpop.f32.mrf.mxu0
    %v1280 = vadd.f32 0.0, %v1279
    %1281 = vdwg.mxu0
    %v1284 = vrot.slane %v1260, 6
    %v1285 = vrot.slane %v1280, 6
    %v1288 = vadd.f32 %v108, %v1284
    %v1289 = vadd.f32 %v131, %v1285
    %v1290 = vxor.u32 %v1288, 2147483648
    %v1291 = vxor.u32 %v1289, 2147483648
    %v1292 = vmul.f32 %v1290, 1.442695
    %v1293 = vpow.pop %v1292
    %v1294 = vmul.f32 %v1291, 1.442695
    %v1295 = vpow.pop %v1294
    %v1296 = vadd.f32 %v1293, 1.0
    %v1297 = vadd.f32 %v1295, 1.0
    %v1298 = vrcp.pop %v1296
    %v1299 = vmul.f32 %v1296, %v1298
    %v1300 = vsub.f32 1.0, %v1299
    %v1301 = vmul.f32 %v1298, %v1300
    %v1302 = vadd.f32 %v1298, %v1301
    %vm1303 = vweird.f32 %v1296
    %vm1304 = vweird.f32 %v1298
    %vm1305 = vmor %vm1303, %vm1304
    %v1306 = vsel %vm1305, %v1298, %v1302
    %v1307 = vand.u32 2147483647, %v1296
    %vm1308 = vcmp.eq.f32.partialorder %v1307, 8.507059e+37
    %v1309 = vand.u32 %v1296, 2147483648
    %v1310 = vor.u32 1.1754944e-38, %v1309
    %v1311 = vsel %vm1308, %v1310, %v1306
    %v1312 = vmul.f32 1.0, %v1311
    %v1313 = vrcp.pop %v1297
    %v1314 = vmul.f32 %v1297, %v1313
    %v1315 = vsub.f32 1.0, %v1314
    %v1316 = vmul.f32 %v1313, %v1315
    %v1317 = vadd.f32 %v1313, %v1316
    %vm1318 = vweird.f32 %v1297
    %vm1319 = vweird.f32 %v1313
    %vm1320 = vmor %vm1318, %vm1319
    %v1321 = vsel %vm1320, %v1313, %v1317
    %v1322 = vand.u32 2147483647, %v1297
    %vm1323 = vcmp.eq.f32.partialorder %v1322, 8.507059e+37
    %v1324 = vand.u32 %v1297, 2147483648
    %v1325 = vor.u32 1.1754944e-38, %v1324
    %v1326 = vsel %vm1323, %v1325, %v1321
    %v1327 = vmul.f32 1.0, %v1326
    %v1328 = vtanh.pop %v1289
    %v1330 = vrot.slane %v1131, 6
    %v1332 = vmul.f32 %v1312, %v1330
    %1334 = vrot.lane.b32.xlu0 %v1328, 64
    %v1335 = vpop.permute.xlu0 %1334
    %v1337 = vmul.f32 %v1312, %v1335
    %1339 = vrot.lane.b32.xlu0 %v1337, 64
    %v1340 = vpop.permute.xlu0 %1339
    %v1342 = vadd.f32 %v1332, %v1340
    %v1343 = vtanh.pop %v1342
    %1345 = vrot.lane.b32.xlu0 %v1343, 64
    %v1346 = vpop.permute.xlu0 %1345
    %v1348 = vmul.f32 %v1327, %v1346
    %v1350 = vrot.slane %v1238, 6
    %1351 = vrot.lane.b32.xlu0 %v1350, 64
    %v1352 = vpop.permute.xlu0 %1351
    %v1354 = vsel %vm155, %v1348, %v1352
    %v1356 = vrot.slane %v1354, 2
    %1358 = vmatpush.msra.mxu0 %v288
    %1359 = vmatpush.msra.mxu0 %v286
    %1360 = vmatpush.msra.mxu0 %v284
    %1361 = vmatpush.msra.mxu0 %v282
    %1362 = vmatpush.msra.mxu0 %v280
    %1363 = vmatpush.msra.mxu0 %v278
    %1364 = vmatpush.msra.mxu0 %v276
    %1365 = vmatpush.msra.mxu0 %v274
    %1366 = vmatpush.msra.mxu0 %v272
    %1367 = vmatpush.msra.mxu0 %v270
    %1368 = vmatpush.msra.mxu0 %v268
    %1369 = vmatpush.msra.mxu0 %v266
    %1370 = vmatpush.msra.mxu0 %v264
    %1371 = vmatpush.msra.mxu0 %v262
    %1372 = vmatpush.msra.mxu0 %v260
    %1373 = vmatpush.msra.mxu0 %v258
    %1374 = vmatmul.f32.gmra.mxu0 %v1356
    %v1375 = vpop.f32.mrf.mxu0
    %v1376 = vadd.f32 %v135, %v1375
    %1377 = vdwg.mxu0
    %1378 = vmatpush.msra.mxu0 %v289
    %1379 = vmatpush.msra.mxu0 %v287
    %1380 = vmatpush.msra.mxu0 %v285
    %1381 = vmatpush.msra.mxu0 %v283
    %1382 = vmatpush.msra.mxu0 %v281
    %1383 = vmatpush.msra.mxu0 %v279
    %1384 = vmatpush.msra.mxu0 %v277
    %1385 = vmatpush.msra.mxu0 %v275
    %1386 = vmatpush.msra.mxu0 %v273
    %1387 = vmatpush.msra.mxu0 %v271
    %1388 = vmatpush.msra.mxu0 %v269
    %1389 = vmatpush.msra.mxu0 %v267
    %1390 = vmatpush.msra.mxu0 %v265
    %1391 = vmatpush.msra.mxu0 %v263
    %1392 = vmatpush.msra.mxu0 %v261
    %1393 = vmatpush.msra.mxu0 %v259
    %1394 = vmatmul.f32.gmra.mxu0 %v1356
    %v1395 = vpop.f32.mrf.mxu0
    %v1396 = vadd.f32 %v136, %v1395
    %1397 = vdwg.mxu0
    %v1398 = vxor.u32 %v1376, 2147483648
    %v1399 = vxor.u32 %v1396, 2147483648
    %v1400 = vmul.f32 %v1398, 1.442695
    %v1401 = vpow.pop %v1400
    %v1402 = vmul.f32 %v1399, 1.442695
    %v1403 = vpow.pop %v1402
    %v1404 = vadd.f32 %v1401, 1.0
    %v1405 = vadd.f32 %v1403, 1.0
    %v1406 = vrcp.pop %v1404
    %v1407 = vmul.f32 %v1404, %v1406
    %v1408 = vsub.f32 1.0, %v1407
    %v1409 = vmul.f32 %v1406, %v1408
    %v1410 = vadd.f32 %v1406, %v1409
    %vm1411 = vweird.f32 %v1404
    %vm1412 = vweird.f32 %v1406
    %vm1413 = vmor %vm1411, %vm1412
    %v1414 = vsel %vm1413, %v1406, %v1410
    %v1415 = vand.u32 2147483647, %v1404
    %vm1416 = vcmp.eq.f32.partialorder %v1415, 8.507059e+37
    %v1417 = vand.u32 %v1404, 2147483648
    %v1418 = vor.u32 1.1754944e-38, %v1417
    %v1419 = vsel %vm1416, %v1418, %v1414
    %v1420 = vmul.f32 1.0, %v1419
    %v1421 = vrcp.pop %v1405
    %v1422 = vmul.f32 %v1405, %v1421
    %v1423 = vsub.f32 1.0, %v1422
    %v1424 = vmul.f32 %v1421, %v1423
    %v1425 = vadd.f32 %v1421, %v1424
    %vm1426 = vweird.f32 %v1405
    %vm1427 = vweird.f32 %v1421
    %vm1428 = vmor %vm1426, %vm1427
    %v1429 = vsel %vm1428, %v1421, %v1425
    %v1430 = vand.u32 2147483647, %v1405
    %vm1431 = vcmp.eq.f32.partialorder %v1430, 8.507059e+37
    %v1432 = vand.u32 %v1405, 2147483648
    %v1433 = vor.u32 1.1754944e-38, %v1432
    %v1434 = vsel %vm1431, %v1433, %v1429
    %v1435 = vmul.f32 1.0, %v1434
    %v1436 = vtanh.pop %v1396
    %v1437 = vmul.f32 %v1420, %v1232
    %1439 = vrot.lane.b32.xlu0 %v1436, 64
    %v1440 = vpop.permute.xlu0 %1439
    %v1442 = vmul.f32 %v1420, %v1440
    %1444 = vrot.lane.b32.xlu0 %v1442, 64
    %v1445 = vpop.permute.xlu0 %1444
    %v1447 = vadd.f32 %v1437, %v1445
    %v1448 = vtanh.pop %v1447
    %1450 = vrot.lane.b32.xlu0 %v1448, 64
    %v1451 = vpop.permute.xlu0 %1450
    %v1453 = vmul.f32 %v1435, %v1451
    %v1455 = vrot.slane %v1348, 2
    %v1456 = vsel %vm155, %v1455, 0
    %1458 = vmatpush.msra.mxu0 0.0
    %1459 = vmatpush.msra.mxu0 0.0
    %1460 = vmatpush.msra.mxu0 0.0
    %1461 = vmatpush.msra.mxu0 0.0
    %1462 = vmatpush.msra.mxu0 0.0
    %1463 = vmatpush.msra.mxu0 0.0
    %1464 = vmatpush.msra.mxu0 0.0
    %1465 = vmatpush.msra.mxu0 0.0
    %1466 = vmatpush.msra.mxu0 %v153
    %1467 = vmatpush.msra.mxu0 %v151
    %1468 = vmatpush.msra.mxu0 %v149
    %1469 = vmatpush.msra.mxu0 %v147
    %1470 = vmatpush.msra.mxu0 %v145
    %1471 = vmatpush.msra.mxu0 %v143
    %1472 = vmatpush.msra.mxu0 %v141
    %1473 = vmatpush.msra.mxu0 %v139
    %1474 = vmatmul.f32.gmra.mxu0 %v1456
    %v1475 = vpop.f32.mrf.mxu0
    %v1476 = vadd.f32 0.0, %v1475
    %1477 = vdwg.mxu0
    %1478 = vmatpush.msra.mxu0 0.0
    %1479 = vmatpush.msra.mxu0 0.0
    %1480 = vmatpush.msra.mxu0 0.0
    %1481 = vmatpush.msra.mxu0 0.0
    %1482 = vmatpush.msra.mxu0 0.0
    %1483 = vmatpush.msra.mxu0 0.0
    %1484 = vmatpush.msra.mxu0 0.0
    %1485 = vmatpush.msra.mxu0 0.0
    %1486 = vmatpush.msra.mxu0 %v154
    %1487 = vmatpush.msra.mxu0 %v152
    %1488 = vmatpush.msra.mxu0 %v150
    %1489 = vmatpush.msra.mxu0 %v148
    %1490 = vmatpush.msra.mxu0 %v146
    %1491 = vmatpush.msra.mxu0 %v144
    %1492 = vmatpush.msra.mxu0 %v142
    %1493 = vmatpush.msra.mxu0 %v140
    %1494 = vmatmul.f32.gmra.mxu0 %v1456
    %v1495 = vpop.f32.mrf.mxu0
    %v1496 = vadd.f32 0.0, %v1495
    %1497 = vdwg.mxu0
    %v1500 = vrot.slane %v1476, 4
    %v1501 = vrot.slane %v1496, 4
    %v1504 = vadd.f32 %v108, %v1500
    %v1505 = vadd.f32 %v131, %v1501
    %v1506 = vxor.u32 %v1504, 2147483648
    %v1507 = vxor.u32 %v1505, 2147483648
    %v1508 = vmul.f32 %v1506, 1.442695
    %v1509 = vpow.pop %v1508
    %v1510 = vmul.f32 %v1507, 1.442695
    %v1511 = vpow.pop %v1510
    %v1512 = vadd.f32 %v1509, 1.0
    %v1513 = vadd.f32 %v1511, 1.0
    %v1514 = vrcp.pop %v1512
    %v1515 = vmul.f32 %v1512, %v1514
    %v1516 = vsub.f32 1.0, %v1515
    %v1517 = vmul.f32 %v1514, %v1516
    %v1518 = vadd.f32 %v1514, %v1517
    %vm1519 = vweird.f32 %v1512
    %vm1520 = vweird.f32 %v1514
    %vm1521 = vmor %vm1519, %vm1520
    %v1522 = vsel %vm1521, %v1514, %v1518
    %v1523 = vand.u32 2147483647, %v1512
    %vm1524 = vcmp.eq.f32.partialorder %v1523, 8.507059e+37
    %v1525 = vand.u32 %v1512, 2147483648
    %v1526 = vor.u32 1.1754944e-38, %v1525
    %v1527 = vsel %vm1524, %v1526, %v1522
    %v1528 = vmul.f32 1.0, %v1527
    %v1529 = vrcp.pop %v1513
    %v1530 = vmul.f32 %v1513, %v1529
    %v1531 = vsub.f32 1.0, %v1530
    %v1532 = vmul.f32 %v1529, %v1531
    %v1533 = vadd.f32 %v1529, %v1532
    %vm1534 = vweird.f32 %v1513
    %vm1535 = vweird.f32 %v1529
    %vm1536 = vmor %vm1534, %vm1535
    %v1537 = vsel %vm1536, %v1529, %v1533
    %v1538 = vand.u32 2147483647, %v1513
    %vm1539 = vcmp.eq.f32.partialorder %v1538, 8.507059e+37
    %v1540 = vand.u32 %v1513, 2147483648
    %v1541 = vor.u32 1.1754944e-38, %v1540
    %v1542 = vsel %vm1539, %v1541, %v1537
    %v1543 = vmul.f32 1.0, %v1542
    %v1544 = vtanh.pop %v1505
    %v1546 = vrot.slane %v1342, 6
    %v1548 = vmul.f32 %v1528, %v1546
    %1550 = vrot.lane.b32.xlu0 %v1544, 64
    %v1551 = vpop.permute.xlu0 %1550
    %v1553 = vmul.f32 %v1528, %v1551
    %1555 = vrot.lane.b32.xlu0 %v1553, 64
    %v1556 = vpop.permute.xlu0 %1555
    %v1558 = vadd.f32 %v1548, %v1556
    %v1559 = vtanh.pop %v1558
    %1561 = vrot.lane.b32.xlu0 %v1559, 64
    %v1562 = vpop.permute.xlu0 %1561
    %v1564 = vmul.f32 %v1543, %v1562
    %v1566 = vrot.slane %v1453, 4
    %1567 = vrot.lane.b32.xlu0 %v1566, 64
    %v1568 = vpop.permute.xlu0 %1567
    %v1570 = vsel %vm155, %v1564, %v1568
    %v1572 = vrot.slane %v1570, 4
    %1574 = vmatpush.msra.mxu0 %v288
    %1575 = vmatpush.msra.mxu0 %v286
    %1576 = vmatpush.msra.mxu0 %v284
    %1577 = vmatpush.msra.mxu0 %v282
    %1578 = vmatpush.msra.mxu0 %v280
    %1579 = vmatpush.msra.mxu0 %v278
    %1580 = vmatpush.msra.mxu0 %v276
    %1581 = vmatpush.msra.mxu0 %v274
    %1582 = vmatpush.msra.mxu0 %v272
    %1583 = vmatpush.msra.mxu0 %v270
    %1584 = vmatpush.msra.mxu0 %v268
    %1585 = vmatpush.msra.mxu0 %v266
    %1586 = vmatpush.msra.mxu0 %v264
    %1587 = vmatpush.msra.mxu0 %v262
    %1588 = vmatpush.msra.mxu0 %v260
    %1589 = vmatpush.msra.mxu0 %v258
    %1590 = vmatmul.f32.gmra.mxu0 %v1572
    %v1591 = vpop.f32.mrf.mxu0
    %v1592 = vadd.f32 %v135, %v1591
    %1593 = vdwg.mxu0
    %1594 = vmatpush.msra.mxu0 %v289
    %1595 = vmatpush.msra.mxu0 %v287
    %1596 = vmatpush.msra.mxu0 %v285
    %1597 = vmatpush.msra.mxu0 %v283
    %1598 = vmatpush.msra.mxu0 %v281
    %1599 = vmatpush.msra.mxu0 %v279
    %1600 = vmatpush.msra.mxu0 %v277
    %1601 = vmatpush.msra.mxu0 %v275
    %1602 = vmatpush.msra.mxu0 %v273
    %1603 = vmatpush.msra.mxu0 %v271
    %1604 = vmatpush.msra.mxu0 %v269
    %1605 = vmatpush.msra.mxu0 %v267
    %1606 = vmatpush.msra.mxu0 %v265
    %1607 = vmatpush.msra.mxu0 %v263
    %1608 = vmatpush.msra.mxu0 %v261
    %1609 = vmatpush.msra.mxu0 %v259
    %1610 = vmatmul.f32.gmra.mxu0 %v1572
    %v1611 = vpop.f32.mrf.mxu0
    %v1612 = vadd.f32 %v136, %v1611
    %1613 = vdwg.mxu0
    %v1614 = vxor.u32 %v1592, 2147483648
    %v1615 = vxor.u32 %v1612, 2147483648
    %v1616 = vmul.f32 %v1614, 1.442695
    %v1617 = vpow.pop %v1616
    %v1618 = vmul.f32 %v1615, 1.442695
    %v1619 = vpow.pop %v1618
    %v1620 = vadd.f32 %v1617, 1.0
    %v1621 = vadd.f32 %v1619, 1.0
    %v1622 = vrcp.pop %v1620
    %v1623 = vmul.f32 %v1620, %v1622
    %v1624 = vsub.f32 1.0, %v1623
    %v1625 = vmul.f32 %v1622, %v1624
    %v1626 = vadd.f32 %v1622, %v1625
    %vm1627 = vweird.f32 %v1620
    %vm1628 = vweird.f32 %v1622
    %vm1629 = vmor %vm1627, %vm1628
    %v1630 = vsel %vm1629, %v1622, %v1626
    %v1631 = vand.u32 2147483647, %v1620
    %vm1632 = vcmp.eq.f32.partialorder %v1631, 8.507059e+37
    %v1633 = vand.u32 %v1620, 2147483648
    %v1634 = vor.u32 1.1754944e-38, %v1633
    %v1635 = vsel %vm1632, %v1634, %v1630
    %v1636 = vmul.f32 1.0, %v1635
    %v1637 = vrcp.pop %v1621
    %v1638 = vmul.f32 %v1621, %v1637
    %v1639 = vsub.f32 1.0, %v1638
    %v1640 = vmul.f32 %v1637, %v1639
    %v1641 = vadd.f32 %v1637, %v1640
    %vm1642 = vweird.f32 %v1621
    %vm1643 = vweird.f32 %v1637
    %vm1644 = vmor %vm1642, %vm1643
    %v1645 = vsel %vm1644, %v1637, %v1641
    %v1646 = vand.u32 2147483647, %v1621
    %vm1647 = vcmp.eq.f32.partialorder %v1646, 8.507059e+37
    %v1648 = vand.u32 %v1621, 2147483648
    %v1649 = vor.u32 1.1754944e-38, %v1648
    %v1650 = vsel %vm1647, %v1649, %v1645
    %v1651 = vmul.f32 1.0, %v1650
    %v1652 = vtanh.pop %v1612
    %v1653 = vmul.f32 %v1636, %v1447
    %1655 = vrot.lane.b32.xlu0 %v1652, 64
    %v1656 = vpop.permute.xlu0 %1655
    %v1658 = vmul.f32 %v1636, %v1656
    %1660 = vrot.lane.b32.xlu0 %v1658, 64
    %v1661 = vpop.permute.xlu0 %1660
    %v1663 = vadd.f32 %v1653, %v1661
    %v1664 = vtanh.pop %v1663
    %1666 = vrot.lane.b32.xlu0 %v1664, 64
    %v1667 = vpop.permute.xlu0 %1666
    %v1669 = vmul.f32 %v1651, %v1667
    %v1671 = vrot.slane %v1564, 4
    %v1672 = vsel %vm155, %v1671, 0
    %1674 = vmatpush.msra.mxu0 0.0
    %1675 = vmatpush.msra.mxu0 0.0
    %1676 = vmatpush.msra.mxu0 0.0
    %1677 = vmatpush.msra.mxu0 0.0
    %1678 = vmatpush.msra.mxu0 0.0
    %1679 = vmatpush.msra.mxu0 0.0
    %1680 = vmatpush.msra.mxu0 0.0
    %1681 = vmatpush.msra.mxu0 0.0
    %1682 = vmatpush.msra.mxu0 %v153
    %1683 = vmatpush.msra.mxu0 %v151
    %1684 = vmatpush.msra.mxu0 %v149
    %1685 = vmatpush.msra.mxu0 %v147
    %1686 = vmatpush.msra.mxu0 %v145
    %1687 = vmatpush.msra.mxu0 %v143
    %1688 = vmatpush.msra.mxu0 %v141
    %1689 = vmatpush.msra.mxu0 %v139
    %1690 = vmatmul.f32.gmra.mxu0 %v1672
    %v1691 = vpop.f32.mrf.mxu0
    %v1692 = vadd.f32 0.0, %v1691
    %1693 = vdwg.mxu0
    %1694 = vmatpush.msra.mxu0 0.0
    %1695 = vmatpush.msra.mxu0 0.0
    %1696 = vmatpush.msra.mxu0 0.0
    %1697 = vmatpush.msra.mxu0 0.0
    %1698 = vmatpush.msra.mxu0 0.0
    %1699 = vmatpush.msra.mxu0 0.0
    %1700 = vmatpush.msra.mxu0 0.0
    %1701 = vmatpush.msra.mxu0 0.0
    %1702 = vmatpush.msra.mxu0 %v154
    %1703 = vmatpush.msra.mxu0 %v152
    %1704 = vmatpush.msra.mxu0 %v150
    %1705 = vmatpush.msra.mxu0 %v148
    %1706 = vmatpush.msra.mxu0 %v146
    %1707 = vmatpush.msra.mxu0 %v144
    %1708 = vmatpush.msra.mxu0 %v142
    %1709 = vmatpush.msra.mxu0 %v140
    %1710 = vmatmul.f32.gmra.mxu0 %v1672
    %v1711 = vpop.f32.mrf.mxu0
    %v1712 = vadd.f32 0.0, %v1711
    %1713 = vdwg.mxu0
    %v1716 = vrot.slane %v1692, 2
    %v1717 = vrot.slane %v1712, 2
    %v1720 = vadd.f32 %v108, %v1716
    %v1721 = vadd.f32 %v131, %v1717
    %v1722 = vxor.u32 %v1720, 2147483648
    %v1723 = vxor.u32 %v1721, 2147483648
    %v1724 = vmul.f32 %v1722, 1.442695
    %v1725 = vpow.pop %v1724
    %v1726 = vmul.f32 %v1723, 1.442695
    %v1727 = vpow.pop %v1726
    %v1728 = vadd.f32 %v1725, 1.0
    %v1729 = vadd.f32 %v1727, 1.0
    %v1730 = vrcp.pop %v1728
    %v1731 = vmul.f32 %v1728, %v1730
    %v1732 = vsub.f32 1.0, %v1731
    %v1733 = vmul.f32 %v1730, %v1732
    %v1734 = vadd.f32 %v1730, %v1733
    %vm1735 = vweird.f32 %v1728
    %vm1736 = vweird.f32 %v1730
    %vm1737 = vmor %vm1735, %vm1736
    %v1738 = vsel %vm1737, %v1730, %v1734
    %v1739 = vand.u32 2147483647, %v1728
    %vm1740 = vcmp.eq.f32.partialorder %v1739, 8.507059e+37
    %v1741 = vand.u32 %v1728, 2147483648
    %v1742 = vor.u32 1.1754944e-38, %v1741
    %v1743 = vsel %vm1740, %v1742, %v1738
    %v1744 = vmul.f32 1.0, %v1743
    %v1745 = vrcp.pop %v1729
    %v1746 = vmul.f32 %v1729, %v1745
    %v1747 = vsub.f32 1.0, %v1746
    %v1748 = vmul.f32 %v1745, %v1747
    %v1749 = vadd.f32 %v1745, %v1748
    %vm1750 = vweird.f32 %v1729
    %vm1751 = vweird.f32 %v1745
    %vm1752 = vmor %vm1750, %vm1751
    %v1753 = vsel %vm1752, %v1745, %v1749
    %v1754 = vand.u32 2147483647, %v1729
    %vm1755 = vcmp.eq.f32.partialorder %v1754, 8.507059e+37
    %v1756 = vand.u32 %v1729, 2147483648
    %v1757 = vor.u32 1.1754944e-38, %v1756
    %v1758 = vsel %vm1755, %v1757, %v1753
    %v1759 = vmul.f32 1.0, %v1758
    %v1760 = vtanh.pop %v1721
    %v1762 = vrot.slane %v1558, 6
    %v1764 = vmul.f32 %v1744, %v1762
    %1766 = vrot.lane.b32.xlu0 %v1760, 64
    %v1767 = vpop.permute.xlu0 %1766
    %v1769 = vmul.f32 %v1744, %v1767
    %1771 = vrot.lane.b32.xlu0 %v1769, 64
    %v1772 = vpop.permute.xlu0 %1771
    %v1774 = vadd.f32 %v1764, %v1772
    %v1775 = vtanh.pop %v1774
    %1777 = vrot.lane.b32.xlu0 %v1775, 64
    %v1778 = vpop.permute.xlu0 %1777
    %v1780 = vmul.f32 %v1759, %v1778
    %v1782 = vrot.slane %v1669, 2
    %1783 = vrot.lane.b32.xlu0 %v1782, 64
    %v1784 = vpop.permute.xlu0 %1783
    %v1786 = vsel %vm155, %v1780, %v1784
    %v1788 = vrot.slane %v1786, 6
    %1790 = vmatpush.msra.mxu0 %v288
    %1791 = vmatpush.msra.mxu0 %v286
    %1792 = vmatpush.msra.mxu0 %v284
    %1793 = vmatpush.msra.mxu0 %v282
    %1794 = vmatpush.msra.mxu0 %v280
    %1795 = vmatpush.msra.mxu0 %v278
    %1796 = vmatpush.msra.mxu0 %v276
    %1797 = vmatpush.msra.mxu0 %v274
    %1798 = vmatpush.msra.mxu0 %v272
    %1799 = vmatpush.msra.mxu0 %v270
    %1800 = vmatpush.msra.mxu0 %v268
    %1801 = vmatpush.msra.mxu0 %v266
    %1802 = vmatpush.msra.mxu0 %v264
    %1803 = vmatpush.msra.mxu0 %v262
    %1804 = vmatpush.msra.mxu0 %v260
    %1805 = vmatpush.msra.mxu0 %v258
    %1806 = vmatmul.f32.gmra.mxu0 %v1788
    %v1807 = vpop.f32.mrf.mxu0
    %v1808 = vadd.f32 %v135, %v1807
    %1809 = vdwg.mxu0
    %1810 = vmatpush.msra.mxu0 %v289
    %1811 = vmatpush.msra.mxu0 %v287
    %1812 = vmatpush.msra.mxu0 %v285
    %1813 = vmatpush.msra.mxu0 %v283
    %1814 = vmatpush.msra.mxu0 %v281
    %1815 = vmatpush.msra.mxu0 %v279
    %1816 = vmatpush.msra.mxu0 %v277
    %1817 = vmatpush.msra.mxu0 %v275
    %1818 = vmatpush.msra.mxu0 %v273
    %1819 = vmatpush.msra.mxu0 %v271
    %1820 = vmatpush.msra.mxu0 %v269
    %1821 = vmatpush.msra.mxu0 %v267
    %1822 = vmatpush.msra.mxu0 %v265
    %1823 = vmatpush.msra.mxu0 %v263
    %1824 = vmatpush.msra.mxu0 %v261
    %1825 = vmatpush.msra.mxu0 %v259
    %1826 = vmatmul.f32.gmra.mxu0 %v1788
    %v1827 = vpop.f32.mrf.mxu0
    %v1828 = vadd.f32 %v136, %v1827
    %1829 = vdwg.mxu0
    %v1830 = vxor.u32 %v1808, 2147483648
    %v1831 = vxor.u32 %v1828, 2147483648
    %v1832 = vmul.f32 %v1830, 1.442695
    %v1833 = vpow.pop %v1832
    %v1834 = vmul.f32 %v1831, 1.442695
    %v1835 = vpow.pop %v1834
    %v1836 = vadd.f32 %v1833, 1.0
    %v1837 = vadd.f32 %v1835, 1.0
    %v1838 = vrcp.pop %v1836
    %v1839 = vmul.f32 %v1836, %v1838
    %v1840 = vsub.f32 1.0, %v1839
    %v1841 = vmul.f32 %v1838, %v1840
    %v1842 = vadd.f32 %v1838, %v1841
    %vm1843 = vweird.f32 %v1836
    %vm1844 = vweird.f32 %v1838
    %vm1845 = vmor %vm1843, %vm1844
    %v1846 = vsel %vm1845, %v1838, %v1842
    %v1847 = vand.u32 2147483647, %v1836
    %vm1848 = vcmp.eq.f32.partialorder %v1847, 8.507059e+37
    %v1849 = vand.u32 %v1836, 2147483648
    %v1850 = vor.u32 1.1754944e-38, %v1849
    %v1851 = vsel %vm1848, %v1850, %v1846
    %v1852 = vmul.f32 1.0, %v1851
    %v1853 = vrcp.pop %v1837
    %v1854 = vmul.f32 %v1837, %v1853
    %v1855 = vsub.f32 1.0, %v1854
    %v1856 = vmul.f32 %v1853, %v1855
    %v1857 = vadd.f32 %v1853, %v1856
    %vm1858 = vweird.f32 %v1837
    %vm1859 = vweird.f32 %v1853
    %vm1860 = vmor %vm1858, %vm1859
    %v1861 = vsel %vm1860, %v1853, %v1857
    %v1862 = vand.u32 2147483647, %v1837
    %vm1863 = vcmp.eq.f32.partialorder %v1862, 8.507059e+37
    %v1864 = vand.u32 %v1837, 2147483648
    %v1865 = vor.u32 1.1754944e-38, %v1864
    %v1866 = vsel %vm1863, %v1865, %v1861
    %v1867 = vmul.f32 1.0, %v1866
    %v1868 = vtanh.pop %v1828
    %v1869 = vmul.f32 %v1852, %v1663
    %1871 = vrot.lane.b32.xlu0 %v1868, 64
    %v1872 = vpop.permute.xlu0 %1871
    %v1874 = vmul.f32 %v1852, %v1872
    %1876 = vrot.lane.b32.xlu0 %v1874, 64
    %v1877 = vpop.permute.xlu0 %1876
    %v1879 = vadd.f32 %v1869, %v1877
    %v1880 = vtanh.pop %v1879
    %1882 = vrot.lane.b32.xlu0 %v1880, 64
    %v1883 = vpop.permute.xlu0 %1882
    %v1885 = vmul.f32 %v1867, %v1883
    %v1886 = vld [vmem:[%s6] sm:$0x1]
    %v1888 = vperm.slane %v1886, 0
    %v1890 = vmul.f32 %v1885, %v1888
    %vm1891 = vcmask 517120
    %v1892 = vsel %vm1891, %v1890, 0.0
    %1893 = vadd.xlane.f32.xlu0 %v1892
    %v1894 = vpop.xlane.xlu0 %1893
    %v1895 = vld [vmem:[#allocation2] sm:$0x1]
    %v1897 = vperm.slane %v1895, 0
    %v1899 = vadd.f32 %v1894, %v1897
    %vm1900 = vcmask 1024
    %1901 = vst.msk [vmem:[%s8] sm:$0x3] %vm1900, %v1899
    // Predicated region
    $region42: #{lstm_model_forward.1} parent=1 // pred_check
      _
    $region43: #{lstm_model_forward.1} parent=1 // pred_check_branch
      %1903 = sbr.rel (0) target = $region45
    $region44: #{lstm_model_forward.1} parent=1 // pred_region
      _
    $region45: #{lstm_model_forward.1} parent=1 // pred_fallthru
      _
    // Predicated region
    $region46: #{lstm_model_forward.1} parent=1 // pred_check
      _
    $region47: #{lstm_model_forward.1} parent=1 // pred_check_branch
      %1905 = sbr.rel (0) target = $region49
    $region48: #{lstm_model_forward.1} parent=1 // pred_region
      _
    $region49: #{lstm_model_forward.1} parent=1 // pred_fallthru
      _
    %1906 = vsyncpa [#allocation4], 1
    %1907 = vsyncpa [#allocation6], 1

</llo_original>
